<compile_context>
chip_gen: v6e
topology: v6e:2x2x1
jax: 0.10.0
libtpu: 0.0.40
codegen_flags: <defaults>
</compile_context>

<pallas_src>
import math

import jax
import jax.numpy as jnp
from jax.experimental import pallas as pl
from jax.experimental.pallas import tpu as pltpu

# ---- synthetic config (small, layout-friendly) ----
B, S, H, NH, F, C, V = 8, 8, 128, 4, 256, 8, 64   # batch, seq, hidden, heads, ffn, classes, vocab
HD = H // NH
SB = S * B
INIT_RANGE = 0.02
DROP_RATES = (0.1, 0.2, 0.3, 0.4, 0.5)

# packed small-parameter / small-activation rows: one (40, 256) f32 operand
PACK_ROWS, PACK_W = 40, 256
(R_BQ, R_BK, R_BV, R_BO, R_LN1G, R_LN1B, R_B2, R_LN2G, R_LN2B, R_LINB) = range(10)
R_B1 = 10                 # FFN bias, 256 wide
R_BIAS = 16               # rows 16..23 : (8, 64) attention bias (batch-select + padding)
R_DSCALE = 24             # rows 24..31 : (8, 128) collapsed dropout scale
R_LABEL = 32              # rows 32..39 : (8, 128) zero-padded label

# one (128, 896) bf16 weight slab: Wq|Wk|Wv | Wo | W1 | Head(padded)
WCOL_QKV, WCOL_WO, WCOL_W1, WCOL_LIN = 0, 3 * H, 4 * H, 4 * H + F
WCAT_W = WCOL_LIN + H     # 896


# ----------------------------------------------------------------------------
# One fused kernel: encoder layer + multi-sample dropout head + RMSE loss.
# ----------------------------------------------------------------------------
def fused_forward_kernel(x_ref, pack_ref, wcat_ref, w2_ref, loss_ref):
    x = x_ref[0]                                   # (64, 128) f32, s-major rows (CLS = rows 0..B-1)
    pack = pack_ref[0]                             # (40, 256) f32

    def prow(i):                                   # (1, H) packed row
        return pack[i:i + 1, :H]

    # ---- QKV projection: one (64,128)@(128,384) bf16 matmul ----
    xb = x.astype(jnp.bfloat16)
    qkv = jnp.dot(xb, wcat_ref[:, WCOL_QKV:WCOL_WO],
                  preferred_element_type=jnp.float32)              # (64, 384)
    q_cls = qkv[0:B, 0:H] + prow(R_BQ)                             # (8, 128) CLS queries only
    k = qkv[:, H:2 * H] + prow(R_BK)                               # (64, 128)
    v = qkv[:, 2 * H:3 * H] + prow(R_BV)                           # (64, 128)

    # ---- attention (CLS queries only): per-head plain matmuls over folded keys ----
    bias = pack[R_BIAS:R_BIAS + B, 0:SB]                           # (8, 64): 0 keep / -1e9 masked
    scale = 1.0 / math.sqrt(HD)
    ctx_parts = []
    for h in range(NH):                                            # static unroll (NH=4)
        lo = h * HD
        s = jnp.einsum('qd,kd->qk', q_cls[:, lo:lo + HD], k[:, lo:lo + HD],
                       preferred_element_type=jnp.float32) * scale + bias
        m = jnp.max(s, axis=-1, keepdims=True)
        e = jnp.exp(s - m)
        p = e / jnp.sum(e, axis=-1, keepdims=True)
        ctx_parts.append(jnp.einsum('qk,kd->qd', p, v[:, lo:lo + HD],
                                    preferred_element_type=jnp.float32))
    ctx = jnp.concatenate(ctx_parts, axis=1)                       # (8, 128)
    attn = jnp.dot(ctx.astype(jnp.bfloat16), wcat_ref[:, WCOL_WO:WCOL_W1],
                   preferred_element_type=jnp.float32) + prow(R_BO)

    def layernorm(z, g, b):
        mu = jnp.mean(z, axis=-1, keepdims=True)
        var = jnp.mean((z - mu) ** 2, axis=-1, keepdims=True)
        return (z - mu) * jax.lax.rsqrt(var + 1e-12) * g + b

    # ---- residual + LN + FFN + LN on the (8,128) CLS slab only ----
    x1 = layernorm(x[0:B, :] + attn, prow(R_LN1G), prow(R_LN1B))
    h1 = jax.nn.gelu(
        jnp.dot(x1.astype(jnp.bfloat16), wcat_ref[:, WCOL_W1:WCOL_LIN],
                preferred_element_type=jnp.float32) + pack[R_B1:R_B1 + 1, 0:F],
        approximate=True)  # TODO(synk): HF BERT uses exact erf GELU; tanh approximation used here.
    ffn = jnp.dot(h1.astype(jnp.bfloat16), w2_ref[...],
                  preferred_element_type=jnp.float32) + prow(R_B2)
    x2 = layernorm(x1 + ffn, prow(R_LN2G), prow(R_LN2B))

    # ---- multi-sample dropout head (collapsed by linearity) + RMSE ----
    xm = x2 * pack[R_DSCALE:R_DSCALE + B, 0:H]                     # sum_p drop_p(cls)
    logits = jnp.dot(xm.astype(jnp.bfloat16), wcat_ref[:, WCOL_LIN:WCAT_W],
                     preferred_element_type=jnp.float32) * (1.0 / len(DROP_RATES)) \
             + prow(R_LINB)                                        # (8, 128); cols >= C are 0
    d = logits - pack[R_LABEL:R_LABEL + B, 0:H]                    # pad columns contribute 0
    mse = jnp.sum(d * d) * (1.0 / (B * C))
    loss_ref[...] = jnp.full((1, 1, 128), jnp.sqrt(mse), jnp.float32)


def fused_forward(x, pack, wcat, w2):
    """x: (E, SB, H) f32, pack: (E, 40, 256) f32, wcat: (H, 896) bf16, w2: (F, H) bf16."""
    E = x.shape[0]
    out = pl.pallas_call(
        fused_forward_kernel,
        out_shape=jax.ShapeDtypeStruct((E, 1, 128), jnp.float32),
        grid=(E,),
        in_specs=[
            pl.BlockSpec((1, SB, H), lambda e: (e, 0, 0)),
            pl.BlockSpec((1, PACK_ROWS, PACK_W), lambda e: (e, 0, 0)),
            pl.BlockSpec((H, WCAT_W), lambda e: (0, 0)),           # weights shared across examples
            pl.BlockSpec((F, H), lambda e: (0, 0)),
        ],
        out_specs=pl.BlockSpec((1, 1, 128), lambda e: (e, 0, 0)),
        compiler_params=pltpu.CompilerParams(dimension_semantics=("parallel",)),
    )(x, pack, wcat, w2)
    return out[:, 0, 0]                                            # per-example RMSE


# ----------------------------------------------------------------------------
# Parameters (deterministic synthetic init, mirrors _init_weights semantics).
# ----------------------------------------------------------------------------
def init_params(key):
    ks = jax.random.split(key, 12)
    n = lambda k, shp: (INIT_RANGE * jax.random.normal(k, shp)).astype(jnp.float32)
    z = lambda shp: jnp.zeros(shp, jnp.float32)
    return {
        # TODO(synk): pretrained AutoModel backbone weights cannot be loaded; synthetic init instead.
        "tok_emb": n(ks[0], (V, H)),
        "pos_emb": n(ks[1], (S, H)),
        "wq": n(ks[2], (H, H)), "bq": z((H,)),
        "wk": n(ks[3], (H, H)), "bk": z((H,)),
        "wv": n(ks[4], (H, H)), "bv": z((H,)),
        "wo": n(ks[5], (H, H)), "bo": z((H,)),
        "ln1_g": jnp.ones((H,), jnp.float32), "ln1_b": z((H,)),
        "w1": n(ks[6], (H, F)), "b1": z((F,)),
        "w2": n(ks[7], (F, H)), "b2": z((H,)),
        "ln2_g": jnp.ones((H,), jnp.float32), "ln2_b": z((H,)),
        # head: nn.Linear(hidden, num_classes), weight ~ N(0, initializer_range), bias = 0
        "lin_w": n(ks[8], (H, C)), "lin_b": z((C,)),
    }


def model_forward(params, input_ids, attention_mask, label=None, dropout_key=None):
    if label is None:
        return None        # PyTorch forward() returns loss=None when label is None

    # glue: embedding lookup + positional embedding; permute to (S, B, H) so the
    # B CLS tokens occupy the first contiguous sublanes of the folded slab.
    emb = params["tok_emb"][input_ids] + params["pos_emb"][None, :, :]       # (B, S, H)
    x_sb = jnp.transpose(emb, (1, 0, 2)).reshape(SB, H).astype(jnp.float32)  # row = s*B + b

    # attention bias for CLS queries over the folded key axis:
    # key column j belongs to batch j % B, seq position j // B.
    col = jnp.arange(SB)
    same_batch = (col[None, :] % B == jnp.arange(B)[:, None]).astype(jnp.float32)
    key_keep = attention_mask.astype(jnp.float32)[:, col // B]               # (B, SB)
    attn_bias = (same_batch * key_keep - 1.0) * 1e9                          # 0 keep / -1e9 masked

    # multi-sample dropout collapsed by linearity: dscale = sum_p mask_p / (1 - p)
    # (valid: the reference averages the 5 logits before the RMSE loss)
    # TODO(synk): torch.nn.Dropout RNG has no bit-identical Pallas equivalent; masks drawn with jax.random.
    dkey = dropout_key if dropout_key is not None else jax.random.PRNGKey(0)
    dscale = jnp.zeros((B, H), jnp.float32)
    for i, p in enumerate(DROP_RATES):
        kp = jax.random.fold_in(dkey, i)
        keep = (jax.random.uniform(kp, (B, H)) >= p).astype(jnp.float32)
        dscale = dscale + keep * (1.0 / (1.0 - p))

    # pack every small f32 operand into one lane-dense (40, 256) block
    pack = jnp.zeros((PACK_ROWS, PACK_W), jnp.float32)
    for r, vvec in ((R_BQ, params["bq"]), (R_BK, params["bk"]), (R_BV, params["bv"]),
                    (R_BO, params["bo"]), (R_LN1G, params["ln1_g"]), (R_LN1B, params["ln1_b"]),
                    (R_B2, params["b2"]), (R_LN2G, params["ln2_g"]), (R_LN2B, params["ln2_b"])):
        pack = pack.at[r, :H].set(vvec)
    pack = pack.at[R_LINB, :C].set(params["lin_b"])
    pack = pack.at[R_B1, :F].set(params["b1"])
    pack = pack.at[R_BIAS:R_BIAS + B, :SB].set(attn_bias)
    pack = pack.at[R_DSCALE:R_DSCALE + B, :H].set(dscale)
    pack = pack.at[R_LABEL:R_LABEL + B, :C].set(label.astype(jnp.float32))

    # one (128, 896) bf16 weight slab (f32 accumulation inside the kernel)
    lin_pad = jnp.zeros((H, H), jnp.float32).at[:, :C].set(params["lin_w"])
    wcat = jnp.concatenate([params["wq"], params["wk"], params["wv"],
                            params["wo"], params["w1"], lin_pad], axis=1).astype(jnp.bfloat16)
    w2 = params["w2"].astype(jnp.bfloat16)

    # leading "example" grid axis (E=1 here); stack more examples to amortize
    # per-call overhead and shard across both v7x TensorCores.
    return fused_forward(x_sb[None], pack[None], wcat, w2)[0]


if __name__ == "__main__":
    key = jax.random.PRNGKey(0)
    kp, kid, klab, kdrop = jax.random.split(key, 4)
    params = init_params(kp)

    input_ids = jax.random.randint(kid, (B, S), 0, V, dtype=jnp.int32)
    attention_mask = jnp.ones((B, S), jnp.float32)
    attention_mask = attention_mask.at[:, -2:].set(0.0)   # a bit of padding
    label = jax.random.normal(klab, (B, C), jnp.float32)

    loss = model_forward(params, input_ids, attention_mask, label=label, dropout_key=kdrop)
    jax.block_until_ready(loss)
    assert jnp.isfinite(loss)
    print("KERNEL_OK")
</pallas_src>

<mosaic_0001>
module attributes {stable_mosaic.version = 11 : i64} {
  func.func @fused_forward_kernel(%arg0: i32, %arg1: memref<1x64x128xf32, #tpu.memory_space<vmem>>, %arg2: memref<1x40x256xf32, #tpu.memory_space<vmem>>, %arg3: memref<128x896xbf16, #tpu.memory_space<vmem>>, %arg4: memref<256x128xbf16, #tpu.memory_space<vmem>>, %arg5: memref<1x1x128xf32, #tpu.memory_space<vmem>>) attributes {dimension_semantics = [#tpu.dimension_semantics<parallel>], iteration_bounds = array<i64: 1>, scalar_prefetch = 0 : i64, scratch_operands = 0 : i64, tpu.core_type = #tpu.core_type<tc>, window_params = [{transform_indices = @transform_0, window_bounds = array<i64: 1, 64, 128>}, {transform_indices = @transform_1, window_bounds = array<i64: 1, 40, 256>}, {pipeline_mode = #tpu.pipeline_mode<synchronous>, transform_indices = @transform_2, window_bounds = array<i64: 128, 896>}, {pipeline_mode = #tpu.pipeline_mode<synchronous>, transform_indices = @transform_3, window_bounds = array<i64: 256, 128>}, {transform_indices = @transform_4, window_bounds = array<i64: 1, 1, 128>}]} {
    %c0 = arith.constant 0 : index
    %c0_0 = arith.constant 0 : index
    %c0_1 = arith.constant 0 : index
    %0 = vector.load %arg1[%c0, %c0_0, %c0_1] : memref<1x64x128xf32, #tpu.memory_space<vmem>>, vector<1x64x128xf32>
    %1 = vector.shape_cast %0 : vector<1x64x128xf32> to vector<64x128xf32>
    %c0_2 = arith.constant 0 : index
    %c0_3 = arith.constant 0 : index
    %c0_4 = arith.constant 0 : index
    %2 = vector.load %arg2[%c0_2, %c0_3, %c0_4] : memref<1x40x256xf32, #tpu.memory_space<vmem>>, vector<1x40x256xf32>
    %3 = vector.shape_cast %2 : vector<1x40x256xf32> to vector<40x256xf32>
    %4 = arith.truncf %1 : vector<64x128xf32> to vector<64x128xbf16>
    %c0_5 = arith.constant 0 : index
    %c0_6 = arith.constant 0 : index
    %5 = vector.load %arg3[%c0_5, %c0_6] : memref<128x896xbf16, #tpu.memory_space<vmem>>, vector<128x384xbf16>
    %cst = arith.constant dense<0.000000e+00> : vector<64x384xf32>
    %6 = tpu.matmul %4, %5, %cst {dimension_numbers = #tpu.dot_dimension_numbers<[1], [0], [0], [1], [0, 0, 1, 1], [], []>} : vector<64x128xbf16>, vector<128x384xbf16>, vector<64x384xf32> -> vector<64x384xf32>
    %7 = vector.extract_strided_slice %6 {offsets = [0, 0], sizes = [8, 128], strides = [1, 1]} : vector<64x384xf32> to vector<8x128xf32>
    %8 = vector.extract_strided_slice %3 {offsets = [0, 0], sizes = [1, 128], strides = [1, 1]} : vector<40x256xf32> to vector<1x128xf32>
    %9 = vector.broadcast %8 : vector<1x128xf32> to vector<8x128xf32>
    %10 = arith.addf %7, %9 : vector<8x128xf32>
    %11 = vector.extract_strided_slice %6 {offsets = [0, 128], sizes = [64, 128], strides = [1, 1]} : vector<64x384xf32> to vector<64x128xf32>
    %12 = vector.extract_strided_slice %3 {offsets = [1, 0], sizes = [1, 128], strides = [1, 1]} : vector<40x256xf32> to vector<1x128xf32>
    %13 = vector.broadcast %12 : vector<1x128xf32> to vector<64x128xf32>
    %14 = arith.addf %11, %13 : vector<64x128xf32>
    %15 = vector.extract_strided_slice %6 {offsets = [0, 256], sizes = [64, 128], strides = [1, 1]} : vector<64x384xf32> to vector<64x128xf32>
    %16 = vector.extract_strided_slice %3 {offsets = [2, 0], sizes = [1, 128], strides = [1, 1]} : vector<40x256xf32> to vector<1x128xf32>
    %17 = vector.broadcast %16 : vector<1x128xf32> to vector<64x128xf32>
    %18 = arith.addf %15, %17 : vector<64x128xf32>
    %19 = vector.extract_strided_slice %3 {offsets = [16, 0], sizes = [8, 64], strides = [1, 1]} : vector<40x256xf32> to vector<8x64xf32>
    %20 = vector.extract_strided_slice %10 {offsets = [0, 0], sizes = [8, 32], strides = [1, 1]} : vector<8x128xf32> to vector<8x32xf32>
    %21 = vector.extract_strided_slice %14 {offsets = [0, 0], sizes = [64, 32], strides = [1, 1]} : vector<64x128xf32> to vector<64x32xf32>
    "tpu.trace_start"() <{level = 10 : i32, message = "qd,kd->qk"}> : () -> ()
    %cst_7 = arith.constant dense<0.000000e+00> : vector<8x64xf32>
    %22 = tpu.matmul %20, %21, %cst_7 {dimension_numbers = #tpu.dot_dimension_numbers<[1], [1], [0], [0], [0, 0, 1, 0], [], []>} : vector<8x32xf32>, vector<64x32xf32>, vector<8x64xf32> -> vector<8x64xf32>
    "tpu.trace_stop"() : () -> ()
    %cst_8 = arith.constant 0.176776692 : f32
    %23 = vector.broadcast %cst_8 : f32 to vector<8x64xf32>
    %24 = arith.mulf %22, %23 : vector<8x64xf32>
    %25 = arith.addf %24, %19 : vector<8x64xf32>
    %cst_9 = arith.constant dense<0xFF800000> : vector<8xf32>
    %26 = vector.multi_reduction <maximumf>, %25, %cst_9 [1] : vector<8x64xf32> to vector<8xf32>
    %27 = vector.shape_cast %26 : vector<8xf32> to vector<8x1xf32>
    %28 = vector.broadcast %27 : vector<8x1xf32> to vector<8x64xf32>
    %29 = arith.subf %25, %28 : vector<8x64xf32>
    %30 = math.exp %29 : vector<8x64xf32>
    %cst_10 = arith.constant dense<0.000000e+00> : vector<8xf32>
    %31 = vector.multi_reduction <add>, %30, %cst_10 [1] : vector<8x64xf32> to vector<8xf32>
    %32 = vector.shape_cast %31 : vector<8xf32> to vector<8x1xf32>
    %33 = vector.broadcast %32 : vector<8x1xf32> to vector<8x64xf32>
    %34 = arith.divf %30, %33 : vector<8x64xf32>
    %35 = vector.extract_strided_slice %18 {offsets = [0, 0], sizes = [64, 32], strides = [1, 1]} : vector<64x128xf32> to vector<64x32xf32>
    "tpu.trace_start"() <{level = 10 : i32, message = "qk,kd->qd"}> : () -> ()
    %cst_11 = arith.constant dense<0.000000e+00> : vector<8x32xf32>
    %36 = tpu.matmul %34, %35, %cst_11 {dimension_numbers = #tpu.dot_dimension_numbers<[1], [0], [0], [1], [0, 0, 1, 1], [], []>} : vector<8x64xf32>, vector<64x32xf32>, vector<8x32xf32> -> vector<8x32xf32>
    "tpu.trace_stop"() : () -> ()
    %37 = vector.extract_strided_slice %10 {offsets = [0, 32], sizes = [8, 32], strides = [1, 1]} : vector<8x128xf32> to vector<8x32xf32>
    %38 = vector.extract_strided_slice %14 {offsets = [0, 32], sizes = [64, 32], strides = [1, 1]} : vector<64x128xf32> to vector<64x32xf32>
    "tpu.trace_start"() <{level = 10 : i32, message = "qd,kd->qk"}> : () -> ()
    %cst_12 = arith.constant dense<0.000000e+00> : vector<8x64xf32>
    %39 = tpu.matmul %37, %38, %cst_12 {dimension_numbers = #tpu.dot_dimension_numbers<[1], [1], [0], [0], [0, 0, 1, 0], [], []>} : vector<8x32xf32>, vector<64x32xf32>, vector<8x64xf32> -> vector<8x64xf32>
    "tpu.trace_stop"() : () -> ()
    %cst_13 = arith.constant 0.176776692 : f32
    %40 = vector.broadcast %cst_13 : f32 to vector<8x64xf32>
    %41 = arith.mulf %39, %40 : vector<8x64xf32>
    %42 = arith.addf %41, %19 : vector<8x64xf32>
    %cst_14 = arith.constant dense<0xFF800000> : vector<8xf32>
    %43 = vector.multi_reduction <maximumf>, %42, %cst_14 [1] : vector<8x64xf32> to vector<8xf32>
    %44 = vector.shape_cast %43 : vector<8xf32> to vector<8x1xf32>
    %45 = vector.broadcast %44 : vector<8x1xf32> to vector<8x64xf32>
    %46 = arith.subf %42, %45 : vector<8x64xf32>
    %47 = math.exp %46 : vector<8x64xf32>
    %cst_15 = arith.constant dense<0.000000e+00> : vector<8xf32>
    %48 = vector.multi_reduction <add>, %47, %cst_15 [1] : vector<8x64xf32> to vector<8xf32>
    %49 = vector.shape_cast %48 : vector<8xf32> to vector<8x1xf32>
    %50 = vector.broadcast %49 : vector<8x1xf32> to vector<8x64xf32>
    %51 = arith.divf %47, %50 : vector<8x64xf32>
    %52 = vector.extract_strided_slice %18 {offsets = [0, 32], sizes = [64, 32], strides = [1, 1]} : vector<64x128xf32> to vector<64x32xf32>
    "tpu.trace_start"() <{level = 10 : i32, message = "qk,kd->qd"}> : () -> ()
    %cst_16 = arith.constant dense<0.000000e+00> : vector<8x32xf32>
    %53 = tpu.matmul %51, %52, %cst_16 {dimension_numbers = #tpu.dot_dimension_numbers<[1], [0], [0], [1], [0, 0, 1, 1], [], []>} : vector<8x64xf32>, vector<64x32xf32>, vector<8x32xf32> -> vector<8x32xf32>
    "tpu.trace_stop"() : () -> ()
    %54 = vector.extract_strided_slice %10 {offsets = [0, 64], sizes = [8, 32], strides = [1, 1]} : vector<8x128xf32> to vector<8x32xf32>
    %55 = vector.extract_strided_slice %14 {offsets = [0, 64], sizes = [64, 32], strides = [1, 1]} : vector<64x128xf32> to vector<64x32xf32>
    "tpu.trace_start"() <{level = 10 : i32, message = "qd,kd->qk"}> : () -> ()
    %cst_17 = arith.constant dense<0.000000e+00> : vector<8x64xf32>
    %56 = tpu.matmul %54, %55, %cst_17 {dimension_numbers = #tpu.dot_dimension_numbers<[1], [1], [0], [0], [0, 0, 1, 0], [], []>} : vector<8x32xf32>, vector<64x32xf32>, vector<8x64xf32> -> vector<8x64xf32>
    "tpu.trace_stop"() : () -> ()
    %cst_18 = arith.constant 0.176776692 : f32
    %57 = vector.broadcast %cst_18 : f32 to vector<8x64xf32>
    %58 = arith.mulf %56, %57 : vector<8x64xf32>
    %59 = arith.addf %58, %19 : vector<8x64xf32>
    %cst_19 = arith.constant dense<0xFF800000> : vector<8xf32>
    %60 = vector.multi_reduction <maximumf>, %59, %cst_19 [1] : vector<8x64xf32> to vector<8xf32>
    %61 = vector.shape_cast %60 : vector<8xf32> to vector<8x1xf32>
    %62 = vector.broadcast %61 : vector<8x1xf32> to vector<8x64xf32>
    %63 = arith.subf %59, %62 : vector<8x64xf32>
    %64 = math.exp %63 : vector<8x64xf32>
    %cst_20 = arith.constant dense<0.000000e+00> : vector<8xf32>
    %65 = vector.multi_reduction <add>, %64, %cst_20 [1] : vector<8x64xf32> to vector<8xf32>
    %66 = vector.shape_cast %65 : vector<8xf32> to vector<8x1xf32>
    %67 = vector.broadcast %66 : vector<8x1xf32> to vector<8x64xf32>
    %68 = arith.divf %64, %67 : vector<8x64xf32>
    %69 = vector.extract_strided_slice %18 {offsets = [0, 64], sizes = [64, 32], strides = [1, 1]} : vector<64x128xf32> to vector<64x32xf32>
    "tpu.trace_start"() <{level = 10 : i32, message = "qk,kd->qd"}> : () -> ()
    %cst_21 = arith.constant dense<0.000000e+00> : vector<8x32xf32>
    %70 = tpu.matmul %68, %69, %cst_21 {dimension_numbers = #tpu.dot_dimension_numbers<[1], [0], [0], [1], [0, 0, 1, 1], [], []>} : vector<8x64xf32>, vector<64x32xf32>, vector<8x32xf32> -> vector<8x32xf32>
    "tpu.trace_stop"() : () -> ()
    %71 = vector.extract_strided_slice %10 {offsets = [0, 96], sizes = [8, 32], strides = [1, 1]} : vector<8x128xf32> to vector<8x32xf32>
    %72 = vector.extract_strided_slice %14 {offsets = [0, 96], sizes = [64, 32], strides = [1, 1]} : vector<64x128xf32> to vector<64x32xf32>
    "tpu.trace_start"() <{level = 10 : i32, message = "qd,kd->qk"}> : () -> ()
    %cst_22 = arith.constant dense<0.000000e+00> : vector<8x64xf32>
    %73 = tpu.matmul %71, %72, %cst_22 {dimension_numbers = #tpu.dot_dimension_numbers<[1], [1], [0], [0], [0, 0, 1, 0], [], []>} : vector<8x32xf32>, vector<64x32xf32>, vector<8x64xf32> -> vector<8x64xf32>
    "tpu.trace_stop"() : () -> ()
    %cst_23 = arith.constant 0.176776692 : f32
    %74 = vector.broadcast %cst_23 : f32 to vector<8x64xf32>
    %75 = arith.mulf %73, %74 : vector<8x64xf32>
    %76 = arith.addf %75, %19 : vector<8x64xf32>
    %cst_24 = arith.constant dense<0xFF800000> : vector<8xf32>
    %77 = vector.multi_reduction <maximumf>, %76, %cst_24 [1] : vector<8x64xf32> to vector<8xf32>
    %78 = vector.shape_cast %77 : vector<8xf32> to vector<8x1xf32>
    %79 = vector.broadcast %78 : vector<8x1xf32> to vector<8x64xf32>
    %80 = arith.subf %76, %79 : vector<8x64xf32>
    %81 = math.exp %80 : vector<8x64xf32>
    %cst_25 = arith.constant dense<0.000000e+00> : vector<8xf32>
    %82 = vector.multi_reduction <add>, %81, %cst_25 [1] : vector<8x64xf32> to vector<8xf32>
    %83 = vector.shape_cast %82 : vector<8xf32> to vector<8x1xf32>
    %84 = vector.broadcast %83 : vector<8x1xf32> to vector<8x64xf32>
    %85 = arith.divf %81, %84 : vector<8x64xf32>
    %86 = vector.extract_strided_slice %18 {offsets = [0, 96], sizes = [64, 32], strides = [1, 1]} : vector<64x128xf32> to vector<64x32xf32>
    "tpu.trace_start"() <{level = 10 : i32, message = "qk,kd->qd"}> : () -> ()
    %cst_26 = arith.constant dense<0.000000e+00> : vector<8x32xf32>
    %87 = tpu.matmul %85, %86, %cst_26 {dimension_numbers = #tpu.dot_dimension_numbers<[1], [0], [0], [1], [0, 0, 1, 1], [], []>} : vector<8x64xf32>, vector<64x32xf32>, vector<8x32xf32> -> vector<8x32xf32>
    "tpu.trace_stop"() : () -> ()
    %88 = tpu.concatenate %36, %53, %70, %87 in 1 : vector<8x32xf32>, vector<8x32xf32>, vector<8x32xf32>, vector<8x32xf32> -> vector<8x128xf32>
    %89 = arith.truncf %88 : vector<8x128xf32> to vector<8x128xbf16>
    %c0_27 = arith.constant 0 : index
    %c384 = arith.constant 384 : index
    %90 = vector.load %arg3[%c0_27, %c384] : memref<128x896xbf16, #tpu.memory_space<vmem>>, vector<128x128xbf16>
    %cst_28 = arith.constant dense<0.000000e+00> : vector<8x128xf32>
    %91 = tpu.matmul %89, %90, %cst_28 {dimension_numbers = #tpu.dot_dimension_numbers<[1], [0], [0], [1], [0, 0, 1, 1], [], []>} : vector<8x128xbf16>, vector<128x128xbf16>, vector<8x128xf32> -> vector<8x128xf32>
    %92 = vector.extract_strided_slice %3 {offsets = [3, 0], sizes = [1, 128], strides = [1, 1]} : vector<40x256xf32> to vector<1x128xf32>
    %93 = vector.broadcast %92 : vector<1x128xf32> to vector<8x128xf32>
    %94 = arith.addf %91, %93 : vector<8x128xf32>
    %95 = vector.extract_strided_slice %1 {offsets = [0, 0], sizes = [8, 128], strides = [1, 1]} : vector<64x128xf32> to vector<8x128xf32>
    %96 = arith.addf %95, %94 : vector<8x128xf32>
    %97 = vector.extract_strided_slice %3 {offsets = [4, 0], sizes = [1, 128], strides = [1, 1]} : vector<40x256xf32> to vector<1x128xf32>
    %98 = vector.extract_strided_slice %3 {offsets = [5, 0], sizes = [1, 128], strides = [1, 1]} : vector<40x256xf32> to vector<1x128xf32>
    %cst_29 = arith.constant dense<0.000000e+00> : vector<8xf32>
    %99 = vector.multi_reduction <add>, %96, %cst_29 [1] : vector<8x128xf32> to vector<8xf32>
    %100 = vector.shape_cast %99 : vector<8xf32> to vector<8x1xf32>
    %cst_30 = arith.constant 1.280000e+02 : f32
    %101 = vector.broadcast %cst_30 : f32 to vector<8x1xf32>
    %102 = arith.divf %100, %101 : vector<8x1xf32>
    %103 = vector.broadcast %102 : vector<8x1xf32> to vector<8x128xf32>
    %104 = arith.subf %96, %103 : vector<8x128xf32>
    %105 = arith.mulf %104, %104 : vector<8x128xf32>
    %cst_31 = arith.constant dense<0.000000e+00> : vector<8xf32>
    %106 = vector.multi_reduction <add>, %105, %cst_31 [1] : vector<8x128xf32> to vector<8xf32>
    %107 = vector.shape_cast %106 : vector<8xf32> to vector<8x1xf32>
    %cst_32 = arith.constant 1.280000e+02 : f32
    %108 = vector.broadcast %cst_32 : f32 to vector<8x1xf32>
    %109 = arith.divf %107, %108 : vector<8x1xf32>
    %110 = vector.broadcast %102 : vector<8x1xf32> to vector<8x128xf32>
    %111 = arith.subf %96, %110 : vector<8x128xf32>
    %cst_33 = arith.constant 9.99999996E-13 : f32
    %112 = vector.broadcast %cst_33 : f32 to vector<8x1xf32>
    %113 = arith.addf %109, %112 : vector<8x1xf32>
    %114 = math.rsqrt %113 : vector<8x1xf32>
    %115 = vector.broadcast %114 : vector<8x1xf32> to vector<8x128xf32>
    %116 = arith.mulf %111, %115 : vector<8x128xf32>
    %117 = vector.broadcast %97 : vector<1x128xf32> to vector<8x128xf32>
    %118 = arith.mulf %116, %117 : vector<8x128xf32>
    %119 = vector.broadcast %98 : vector<1x128xf32> to vector<8x128xf32>
    %120 = arith.addf %118, %119 : vector<8x128xf32>
    %121 = arith.truncf %120 : vector<8x128xf32> to vector<8x128xbf16>
    %c0_34 = arith.constant 0 : index
    %c512 = arith.constant 512 : index
    %122 = vector.load %arg3[%c0_34, %c512] : memref<128x896xbf16, #tpu.memory_space<vmem>>, vector<128x256xbf16>
    %cst_35 = arith.constant dense<0.000000e+00> : vector<8x256xf32>
    %123 = tpu.matmul %121, %122, %cst_35 {dimension_numbers = #tpu.dot_dimension_numbers<[1], [0], [0], [1], [0, 0, 1, 1], [], []>} : vector<8x128xbf16>, vector<128x256xbf16>, vector<8x256xf32> -> vector<8x256xf32>
    %124 = vector.extract_strided_slice %3 {offsets = [10, 0], sizes = [1, 256], strides = [1, 1]} : vector<40x256xf32> to vector<1x256xf32>
    %125 = vector.broadcast %124 : vector<1x256xf32> to vector<8x256xf32>
    %126 = arith.addf %123, %125 : vector<8x256xf32>
    %127 = arith.mulf %126, %126 : vector<8x256xf32>
    %128 = arith.mulf %126, %127 : vector<8x256xf32>
    %cst_36 = arith.constant 4.471500e-02 : f32
    %129 = vector.broadcast %cst_36 : f32 to vector<8x256xf32>
    %130 = arith.mulf %129, %128 : vector<8x256xf32>
    %131 = arith.addf %126, %130 : vector<8x256xf32>
    %cst_37 = arith.constant 0.797884583 : f32
    %132 = vector.broadcast %cst_37 : f32 to vector<8x256xf32>
    %133 = arith.mulf %132, %131 : vector<8x256xf32>
    %134 = math.tanh %133 : vector<8x256xf32>
    %cst_38 = arith.constant 1.000000e+00 : f32
    %135 = vector.broadcast %cst_38 : f32 to vector<8x256xf32>
    %136 = arith.addf %135, %134 : vector<8x256xf32>
    %cst_39 = arith.constant 5.000000e-01 : f32
    %137 = vector.broadcast %cst_39 : f32 to vector<8x256xf32>
    %138 = arith.mulf %137, %136 : vector<8x256xf32>
    %139 = arith.mulf %126, %138 : vector<8x256xf32>
    %140 = arith.truncf %139 : vector<8x256xf32> to vector<8x256xbf16>
    %c0_40 = arith.constant 0 : index
    %c0_41 = arith.constant 0 : index
    %141 = vector.load %arg4[%c0_40, %c0_41] : memref<256x128xbf16, #tpu.memory_space<vmem>>, vector<256x128xbf16>
    %cst_42 = arith.constant dense<0.000000e+00> : vector<8x128xf32>
    %142 = tpu.matmul %140, %141, %cst_42 {dimension_numbers = #tpu.dot_dimension_numbers<[1], [0], [0], [1], [0, 0, 1, 1], [], []>} : vector<8x256xbf16>, vector<256x128xbf16>, vector<8x128xf32> -> vector<8x128xf32>
    %143 = vector.extract_strided_slice %3 {offsets = [6, 0], sizes = [1, 128], strides = [1, 1]} : vector<40x256xf32> to vector<1x128xf32>
    %144 = vector.broadcast %143 : vector<1x128xf32> to vector<8x128xf32>
    %145 = arith.addf %142, %144 : vector<8x128xf32>
    %146 = arith.addf %120, %145 : vector<8x128xf32>
    %147 = vector.extract_strided_slice %3 {offsets = [7, 0], sizes = [1, 128], strides = [1, 1]} : vector<40x256xf32> to vector<1x128xf32>
    %148 = vector.extract_strided_slice %3 {offsets = [8, 0], sizes = [1, 128], strides = [1, 1]} : vector<40x256xf32> to vector<1x128xf32>
    %cst_43 = arith.constant dense<0.000000e+00> : vector<8xf32>
    %149 = vector.multi_reduction <add>, %146, %cst_43 [1] : vector<8x128xf32> to vector<8xf32>
    %150 = vector.shape_cast %149 : vector<8xf32> to vector<8x1xf32>
    %cst_44 = arith.constant 1.280000e+02 : f32
    %151 = vector.broadcast %cst_44 : f32 to vector<8x1xf32>
    %152 = arith.divf %150, %151 : vector<8x1xf32>
    %153 = vector.broadcast %152 : vector<8x1xf32> to vector<8x128xf32>
    %154 = arith.subf %146, %153 : vector<8x128xf32>
    %155 = arith.mulf %154, %154 : vector<8x128xf32>
    %cst_45 = arith.constant dense<0.000000e+00> : vector<8xf32>
    %156 = vector.multi_reduction <add>, %155, %cst_45 [1] : vector<8x128xf32> to vector<8xf32>
    %157 = vector.shape_cast %156 : vector<8xf32> to vector<8x1xf32>
    %cst_46 = arith.constant 1.280000e+02 : f32
    %158 = vector.broadcast %cst_46 : f32 to vector<8x1xf32>
    %159 = arith.divf %157, %158 : vector<8x1xf32>
    %160 = vector.broadcast %152 : vector<8x1xf32> to vector<8x128xf32>
    %161 = arith.subf %146, %160 : vector<8x128xf32>
    %cst_47 = arith.constant 9.99999996E-13 : f32
    %162 = vector.broadcast %cst_47 : f32 to vector<8x1xf32>
    %163 = arith.addf %159, %162 : vector<8x1xf32>
    %164 = math.rsqrt %163 : vector<8x1xf32>
    %165 = vector.broadcast %164 : vector<8x1xf32> to vector<8x128xf32>
    %166 = arith.mulf %161, %165 : vector<8x128xf32>
    %167 = vector.broadcast %147 : vector<1x128xf32> to vector<8x128xf32>
    %168 = arith.mulf %166, %167 : vector<8x128xf32>
    %169 = vector.broadcast %148 : vector<1x128xf32> to vector<8x128xf32>
    %170 = arith.addf %168, %169 : vector<8x128xf32>
    %171 = vector.extract_strided_slice %3 {offsets = [24, 0], sizes = [8, 128], strides = [1, 1]} : vector<40x256xf32> to vector<8x128xf32>
    %172 = arith.mulf %170, %171 : vector<8x128xf32>
    %173 = arith.truncf %172 : vector<8x128xf32> to vector<8x128xbf16>
    %c0_48 = arith.constant 0 : index
    %c768 = arith.constant 768 : index
    %174 = vector.load %arg3[%c0_48, %c768] : memref<128x896xbf16, #tpu.memory_space<vmem>>, vector<128x128xbf16>
    %cst_49 = arith.constant dense<0.000000e+00> : vector<8x128xf32>
    %175 = tpu.matmul %173, %174, %cst_49 {dimension_numbers = #tpu.dot_dimension_numbers<[1], [0], [0], [1], [0, 0, 1, 1], [], []>} : vector<8x128xbf16>, vector<128x128xbf16>, vector<8x128xf32> -> vector<8x128xf32>
    %cst_50 = arith.constant 2.000000e-01 : f32
    %176 = vector.broadcast %cst_50 : f32 to vector<8x128xf32>
    %177 = arith.mulf %175, %176 : vector<8x128xf32>
    %178 = vector.extract_strided_slice %3 {offsets = [9, 0], sizes = [1, 128], strides = [1, 1]} : vector<40x256xf32> to vector<1x128xf32>
    %179 = vector.broadcast %178 : vector<1x128xf32> to vector<8x128xf32>
    %180 = arith.addf %177, %179 : vector<8x128xf32>
    %181 = vector.extract_strided_slice %3 {offsets = [32, 0], sizes = [8, 128], strides = [1, 1]} : vector<40x256xf32> to vector<8x128xf32>
    %182 = arith.subf %180, %181 : vector<8x128xf32>
    %183 = arith.mulf %182, %182 : vector<8x128xf32>
    %184 = vector.shape_cast %183 : vector<8x128xf32> to vector<1x8x128xf32>
    %cst_51 = arith.constant dense<0.000000e+00> : vector<1xf32>
    %185 = vector.multi_reduction <add>, %184, %cst_51 [1, 2] : vector<1x8x128xf32> to vector<1xf32>
    %186 = vector.shape_cast %185 : vector<1xf32> to vector<1x1x1xf32>
    %187 = vector.extract %186[0, 0, 0] : f32 from vector<1x1x1xf32>
    %cst_52 = arith.constant 1.562500e-02 : f32
    %188 = arith.mulf %187, %cst_52 : f32
    %189 = math.sqrt %188 : f32
    %190 = vector.broadcast %189 : f32 to vector<1x1x128xf32>
    %c0_53 = arith.constant 0 : index
    %c0_54 = arith.constant 0 : index
    %c0_55 = arith.constant 0 : index
    %191 = vector.load %arg5[%c0_53, %c0_54, %c0_55] : memref<1x1x128xf32, #tpu.memory_space<vmem>>, vector<1x1x128xf32>
    tpu.vector_store %arg5[%c0_53, %c0_54, %c0_55], %190 {strides = array<i32>} : memref<1x1x128xf32, #tpu.memory_space<vmem>>, vector<1x1x128xf32>,
    return
  }
  func.func @transform_0(%arg0: i32) -> (i32, i32, i32) {
    %c0_i32 = arith.constant 0 : i32
    %c0_i32_0 = arith.constant 0 : i32
    %c0_i32_1 = arith.constant 0 : i32
    return %arg0, %c0_i32, %c0_i32_0 : i32, i32, i32
  }
  func.func @transform_1(%arg0: i32) -> (i32, i32, i32) {
    %c0_i32 = arith.constant 0 : i32
    %c0_i32_0 = arith.constant 0 : i32
    %c0_i32_1 = arith.constant 0 : i32
    return %arg0, %c0_i32, %c0_i32_0 : i32, i32, i32
  }
  func.func @transform_2(%arg0: i32) -> (i32, i32) {
    %c0_i32 = arith.constant 0 : i32
    %c0_i32_0 = arith.constant 0 : i32
    %c0_i32_1 = arith.constant 0 : i32
    return %c0_i32, %c0_i32_0 : i32, i32
  }
  func.func @transform_3(%arg0: i32) -> (i32, i32) {
    %c0_i32 = arith.constant 0 : i32
    %c0_i32_0 = arith.constant 0 : i32
    %c0_i32_1 = arith.constant 0 : i32
    return %c0_i32, %c0_i32_0 : i32, i32
  }
  func.func @transform_4(%arg0: i32) -> (i32, i32, i32) {
    %c0_i32 = arith.constant 0 : i32
    %c0_i32_0 = arith.constant 0 : i32
    %c0_i32_1 = arith.constant 0 : i32
    return %arg0, %c0_i32, %c0_i32_0 : i32, i32, i32
  }
}

</mosaic_0001>

<llo_original>
// kernel: tpu_custom_call.1
$region0: #{tpu_custom_call.1}
  #allocation0 [shape = 'u32[]', space=smem, size = 0x4, offset = 0x4, fixed_abs, tag = 'smem constant byte address 0x4 - core index']
  #allocation1 [shape = 'u32[144,128]{1,0:T(1,128)}', space=vmem, size = 0x12000, scoped, tag = 'internal scratch']
  %s0 = inlined_call_operand.hbm [shape: f32[1,64,128], index: 0, kind: input, shape index: {}]
  %s1 = inlined_call_operand.hbm [shape: f32[1,40,256], index: 1, kind: input, shape index: {}]
  %s2 = inlined_call_operand.hbm [shape: bf16[128,896], index: 2, kind: input, shape index: {}]
  %s3 = inlined_call_operand.hbm [shape: bf16[256,128], index: 3, kind: input, shape index: {}]
  %s4 = inlined_call_operand.hbm [shape: f32[1,1,128], index: 4, kind: output, shape index: {}]
  %s5 = sld [smem:[#allocation0]]
  $region42: #{tpu_custom_call.1} parent=0
    _
  %s7 = ssub.s32 1, %s5
  %s8 = scalar_select 0, %s7, %s5
  $region1: #{tpu_custom_call.1} parent=0
    #allocation2 [shape = 'u8[32768]{0}', space=vmem, size = 0x8000, scoped, tag = 'input window, operand 0, single buffered']
    #allocation3 [shape = 's32[1]{0}', space=sflag, size = 0x4, scoped, tag = 'scoped memory for tpu_custom_call.1']
    #allocation4 [shape = 's32[1]{0}', space=sflag, size = 0x4, scoped, tag = 'scoped memory for tpu_custom_call.1']
    #allocation5 [shape = 'u8[40960]{0}', space=vmem, size = 0xa000, scoped, tag = 'input window, operand 1, single buffered']
    #allocation6 [shape = 's32[1]{0}', space=sflag, size = 0x4, scoped, tag = 'scoped memory for tpu_custom_call.1']
    #allocation7 [shape = 'u8[229376]{0}', space=vmem, size = 0x38000, scoped, tag = 'input window, operand 2, single buffered']
    #allocation8 [shape = 'u8[65536]{0}', space=vmem, size = 0x10000, scoped, tag = 'input window, operand 3, single buffered']
    #allocation9 [shape = 's32[1]{0}', space=sflag, size = 0x4, scoped, tag = 'scoped memory for tpu_custom_call.1']
    #allocation10 [shape = 'u8[512]{0}', space=vmem, size = 0x400, scoped, tag = 'output window, operand 0, single buffered']
    %9 = vsyncpa [#allocation3], 0
    %10 = vsyncpa [#allocation6], 0
    %11 = vsyncpa [#allocation9], 0
    %12 = vsyncpa [#allocation4], 0
    // Predicated region
    $region2: #{tpu_custom_call.1} parent=1 // pred_check
      _
    $region3: #{tpu_custom_call.1} parent=1 // pred_check_branch
      %14 = sbr.rel (0) target = $region5
    $region4: #{tpu_custom_call.1} parent=1 // pred_region
      %s16 = ssub.s32 1024, 1024
      %17 = vsyncadd [#allocation3], %s16
      %s18 = sshll.u32 [#allocation2], 4
      %s19 = int_to_ptr.vmem [resolvable:$true] %s18
      %24 = dma.hbm_to_vmem [thread:$0]  %s0, 1024, %s19, [#allocation3], 128, 128, 8
    $region5: #{tpu_custom_call.1} parent=1 // pred_fallthru
      _
    // Predicated region
    $region6: #{tpu_custom_call.1} parent=1 // pred_check
      _
    $region7: #{tpu_custom_call.1} parent=1 // pred_check_branch
      %26 = sbr.rel (0) target = $region9
    $region8: #{tpu_custom_call.1} parent=1 // pred_region
      %s28 = ssub.s32 1280, 1280
      %29 = vsyncadd [#allocation6], %s28
      %s30 = sshll.u32 [#allocation5], 4
      %s31 = int_to_ptr.vmem [resolvable:$true] %s30
      %36 = dma.hbm_to_vmem [thread:$0]  %s1, 1280, %s31, [#allocation6], 256, 256, 16
    $region9: #{tpu_custom_call.1} parent=1 // pred_fallthru
      _
    // Predicated region
    $region10: #{tpu_custom_call.1} parent=1 // pred_check
      _
    $region11: #{tpu_custom_call.1} parent=1 // pred_check_branch
      %38 = sbr.rel (0) target = $region13
    $region12: #{tpu_custom_call.1} parent=1 // pred_region
      %s40 = ssub.s32 7168, 7168
      %41 = vsyncadd [#allocation6], %s40
      %s42 = sshll.u32 [#allocation7], 4
      %s43 = int_to_ptr.vmem [resolvable:$true] %s42
      %48 = dma.hbm_to_vmem [thread:$0]  %s2, 7168, %s43, [#allocation6], 448, 448, 28
    $region13: #{tpu_custom_call.1} parent=1 // pred_fallthru
      _
    // Predicated region
    $region14: #{tpu_custom_call.1} parent=1 // pred_check
      _
    $region15: #{tpu_custom_call.1} parent=1 // pred_check_branch
      %50 = sbr.rel (0) target = $region17
    $region16: #{tpu_custom_call.1} parent=1 // pred_region
      %s52 = ssub.s32 2048, 2048
      %53 = vsyncadd [#allocation9], %s52
      %s54 = sshll.u32 [#allocation8], 4
      %s55 = int_to_ptr.vmem [resolvable:$true] %s54
      %60 = dma.hbm_to_vmem [thread:$0]  %s3, 2048, %s55, [#allocation9], 64, 64, 4
    $region17: #{tpu_custom_call.1} parent=1 // pred_fallthru
      _
    // Predicated region
    $region18: #{tpu_custom_call.1} parent=1 // pred_check
      _
    $region19: #{tpu_custom_call.1} parent=1 // pred_check_branch
      %62 = sbr.rel (0) target = $region21
    $region20: #{tpu_custom_call.1} parent=1 // pred_region
      %63 = dma.done [#allocation3], 1024
    $region21: #{tpu_custom_call.1} parent=1 // pred_fallthru
      _
    // Predicated region
    $region22: #{tpu_custom_call.1} parent=1 // pred_check
      _
    $region23: #{tpu_custom_call.1} parent=1 // pred_check_branch
      %65 = sbr.rel (0) target = $region25
    $region24: #{tpu_custom_call.1} parent=1 // pred_region
      %66 = dma.done [#allocation6], 1280
    $region25: #{tpu_custom_call.1} parent=1 // pred_fallthru
      _
    // Predicated region
    $region26: #{tpu_custom_call.1} parent=1 // pred_check
      _
    $region27: #{tpu_custom_call.1} parent=1 // pred_check_branch
      %68 = sbr.rel (0) target = $region29
    $region28: #{tpu_custom_call.1} parent=1 // pred_region
      %69 = dma.done [#allocation6], 7168
    $region29: #{tpu_custom_call.1} parent=1 // pred_fallthru
      _
    // Predicated region
    $region30: #{tpu_custom_call.1} parent=1 // pred_check
      _
    $region31: #{tpu_custom_call.1} parent=1 // pred_check_branch
      %71 = sbr.rel (0) target = $region33
    $region32: #{tpu_custom_call.1} parent=1 // pred_region
      %72 = dma.done [#allocation9], 2048
    $region33: #{tpu_custom_call.1} parent=1 // pred_fallthru
      _
    %v74 = vld [vmem:[#allocation2] sm:$0xff]
    %v75 = vld [vmem:[#allocation2 + $0x8] sm:$0xff]
    %v76 = vld [vmem:[#allocation2 + $0x10] sm:$0xff]
    %v77 = vld [vmem:[#allocation2 + $0x18] sm:$0xff]
    %v78 = vld [vmem:[#allocation2 + $0x20] sm:$0xff]
    %v79 = vld [vmem:[#allocation2 + $0x28] sm:$0xff]
    %v80 = vld [vmem:[#allocation2 + $0x30] sm:$0xff]
    %v81 = vld [vmem:[#allocation2 + $0x38] sm:$0xff]
    %v82 = vld [vmem:[#allocation5] sm:$0xff]
    %v83 = vld [vmem:[#allocation5 + $0x10] sm:$0xff]
    %v84 = vld [vmem:[#allocation5 + $0x18] sm:$0xff]
    %v85 = vld [vmem:[#allocation5 + $0x20] sm:$0xff]
    %v86 = vld [vmem:[#allocation5 + $0x30] sm:$0xff]
    %v87 = vld [vmem:[#allocation5 + $0x40] sm:$0xff]
    %v88 = vpack.c.bf16 %v75, %v74
    %v89 = vpack.c.bf16 %v77, %v76
    %v90 = vpack.c.bf16 %v79, %v78
    %v91 = vpack.c.bf16 %v81, %v80
    %v92 = vld [vmem:[#allocation7] sm:$0xff]
    %v93 = vld [vmem:[#allocation7 + $0x8] sm:$0xf]
    %v94 = vld [vmem:[#allocation7 + $0x1c] sm:$0xff]
    %v95 = vld [vmem:[#allocation7 + $0x24] sm:$0xf]
    %v96 = vld [vmem:[#allocation7 + $0x38] sm:$0xff]
    %v97 = vld [vmem:[#allocation7 + $0x40] sm:$0xf]
    %v98 = vld [vmem:[#allocation7 + $0x54] sm:$0xff]
    %v99 = vld [vmem:[#allocation7 + $0x5c] sm:$0xf]
    %v100 = vld [vmem:[#allocation7 + $0x70] sm:$0xff]
    %v101 = vld [vmem:[#allocation7 + $0x78] sm:$0xf]
    %v102 = vld [vmem:[#allocation7 + $0x8c] sm:$0xff]
    %v103 = vld [vmem:[#allocation7 + $0x94] sm:$0xf]
    %v104 = vld [vmem:[#allocation7 + $0xa8] sm:$0xff]
    %v105 = vld [vmem:[#allocation7 + $0xb0] sm:$0xf]
    %v106 = vld [vmem:[#allocation7 + $0xc4] sm:$0xff]
    %v107 = vld [vmem:[#allocation7 + $0xcc] sm:$0xf]
    %v108 = vld [vmem:[#allocation7 + $0xe0] sm:$0xff]
    %v109 = vld [vmem:[#allocation7 + $0xe8] sm:$0xf]
    %v110 = vld [vmem:[#allocation7 + $0xfc] sm:$0xff]
    %v111 = vld [vmem:[#allocation7 + $0x104] sm:$0xf]
    %v112 = vld [vmem:[#allocation7 + $0x118] sm:$0xff]
    %v113 = vld [vmem:[#allocation7 + $0x120] sm:$0xf]
    %v114 = vld [vmem:[#allocation7 + $0x134] sm:$0xff]
    %v115 = vld [vmem:[#allocation7 + $0x13c] sm:$0xf]
    %v116 = vld [vmem:[#allocation7 + $0x150] sm:$0xff]
    %v117 = vld [vmem:[#allocation7 + $0x158] sm:$0xf]
    %v118 = vld [vmem:[#allocation7 + $0x16c] sm:$0xff]
    %v119 = vld [vmem:[#allocation7 + $0x174] sm:$0xf]
    %v120 = vld [vmem:[#allocation7 + $0x188] sm:$0xff]
    %v121 = vld [vmem:[#allocation7 + $0x190] sm:$0xf]
    %v122 = vld [vmem:[#allocation7 + $0x1a4] sm:$0xff]
    %v123 = vld [vmem:[#allocation7 + $0x1ac] sm:$0xf]
    %v156 = vunpack.c.l.b16 %v92
    %v157 = vunpack.c.h.b16 %v92
    %v158 = vunpack.c.l.b16 %v93
    %v159 = vunpack.c.l.b16 %v94
    %v160 = vunpack.c.h.b16 %v94
    %v161 = vunpack.c.l.b16 %v95
    %v162 = vunpack.c.l.b16 %v96
    %v163 = vunpack.c.h.b16 %v96
    %v164 = vunpack.c.l.b16 %v97
    %v165 = vunpack.c.l.b16 %v98
    %v166 = vunpack.c.h.b16 %v98
    %v167 = vunpack.c.l.b16 %v99
    %v168 = vunpack.c.l.b16 %v100
    %v169 = vunpack.c.h.b16 %v100
    %v170 = vunpack.c.l.b16 %v101
    %v171 = vunpack.c.l.b16 %v102
    %v172 = vunpack.c.h.b16 %v102
    %v173 = vunpack.c.l.b16 %v103
    %v174 = vunpack.c.l.b16 %v104
    %v175 = vunpack.c.h.b16 %v104
    %v176 = vunpack.c.l.b16 %v105
    %v177 = vunpack.c.l.b16 %v106
    %v178 = vunpack.c.h.b16 %v106
    %v179 = vunpack.c.l.b16 %v107
    %v180 = vunpack.c.l.b16 %v108
    %v181 = vunpack.c.h.b16 %v108
    %v182 = vunpack.c.l.b16 %v109
    %v183 = vunpack.c.l.b16 %v110
    %v184 = vunpack.c.h.b16 %v110
    %v185 = vunpack.c.l.b16 %v111
    %v186 = vunpack.c.l.b16 %v112
    %v187 = vunpack.c.h.b16 %v112
    %v188 = vunpack.c.l.b16 %v113
    %v189 = vunpack.c.l.b16 %v114
    %v190 = vunpack.c.h.b16 %v114
    %v191 = vunpack.c.l.b16 %v115
    %v192 = vunpack.c.l.b16 %v116
    %v193 = vunpack.c.h.b16 %v116
    %v194 = vunpack.c.l.b16 %v117
    %v195 = vunpack.c.l.b16 %v118
    %v196 = vunpack.c.h.b16 %v118
    %v197 = vunpack.c.l.b16 %v119
    %v198 = vunpack.c.l.b16 %v120
    %v199 = vunpack.c.h.b16 %v120
    %v200 = vunpack.c.l.b16 %v121
    %v201 = vunpack.c.l.b16 %v122
    %v202 = vunpack.c.h.b16 %v122
    %v203 = vunpack.c.l.b16 %v123
    %v204 = vpack.c.b16 %v159, %v156
    %v205 = vpack.c.b16 %v160, %v157
    %v206 = vpack.c.b16 %v161, %v158
    %v207 = vpack.c.b16 %v165, %v162
    %v208 = vpack.c.b16 %v166, %v163
    %v209 = vpack.c.b16 %v167, %v164
    %v210 = vpack.c.b16 %v171, %v168
    %v211 = vpack.c.b16 %v172, %v169
    %v212 = vpack.c.b16 %v173, %v170
    %v213 = vpack.c.b16 %v177, %v174
    %v214 = vpack.c.b16 %v178, %v175
    %v215 = vpack.c.b16 %v179, %v176
    %v216 = vpack.c.b16 %v183, %v180
    %v217 = vpack.c.b16 %v184, %v181
    %v218 = vpack.c.b16 %v185, %v182
    %v219 = vpack.c.b16 %v189, %v186
    %v220 = vpack.c.b16 %v190, %v187
    %v221 = vpack.c.b16 %v191, %v188
    %v222 = vpack.c.b16 %v195, %v192
    %v223 = vpack.c.b16 %v196, %v193
    %v224 = vpack.c.b16 %v197, %v194
    %v225 = vpack.c.b16 %v201, %v198
    %v226 = vpack.c.b16 %v202, %v199
    %v227 = vpack.c.b16 %v203, %v200
    %252 = vmatprep.subr.bf16.mxu0 %v226
    %253 = vmatpush1.bf16.msra.mxu0 %v225
    %254 = vmatprep.subr.bf16.mxu0 %v223
    %255 = vmatpush1.bf16.msra.mxu0 %v222
    %256 = vmatprep.subr.bf16.mxu0 %v220
    %257 = vmatpush1.bf16.msra.mxu0 %v219
    %258 = vmatprep.subr.bf16.mxu0 %v217
    %259 = vmatpush1.bf16.msra.mxu0 %v216
    %260 = vmatprep.subr.bf16.mxu0 %v214
    %261 = vmatpush1.bf16.msra.mxu0 %v213
    %262 = vmatprep.subr.bf16.mxu0 %v211
    %263 = vmatpush1.bf16.msra.mxu0 %v210
    %264 = vmatprep.subr.bf16.mxu0 %v208
    %265 = vmatpush1.bf16.msra.mxu0 %v207
    %266 = vmatprep.subr.bf16.mxu0 %v205
    %267 = vmatpush1.bf16.msra.mxu0 %v204
    %268 = vmatprep.subr.bf16.mxu0 0
    %269 = vmatpush2.bf16.msra.mxu0 0
    %270 = vmatprep.subr.bf16.mxu0 0
    %271 = vmatpush2.bf16.msra.mxu0 0
    %272 = vmatprep.subr.bf16.mxu0 0
    %273 = vmatpush2.bf16.msra.mxu0 0
    %274 = vmatprep.subr.bf16.mxu0 0
    %275 = vmatpush2.bf16.msra.mxu0 0
    %276 = vmatprep.subr.bf16.mxu0 0
    %277 = vmatpush2.bf16.msra.mxu0 0
    %278 = vmatprep.subr.bf16.mxu0 0
    %279 = vmatpush2.bf16.msra.mxu0 0
    %280 = vmatprep.subr.bf16.mxu0 0
    %281 = vmatpush2.bf16.msra.mxu0 0
    %282 = vmatprep.subr.bf16.mxu0 0
    %283 = vmatpush2.bf16.msra.mxu0 0
    %284 = vmatprep.mubr.bf16.mxu0 0
    %285 = vmatmul.mubr.bf16.gmra.mxu0 %v88
    %v286 = vpop.f32.mrf.mxu0
    %v287 = vadd.f32 0.0, %v286
    %v288 = vpop.f32.mrf.mxu0
    %v289 = vadd.f32 0.0, %v288
    %v290 = vpop.f32.mrf.mxu0
    %v291 = vpop.f32.mrf.mxu0
    %v292 = vadd.f32 0.0, %v291
    %293 = vmatprep.mubr.bf16.mxu0 0
    %294 = vmatmul.mubr.bf16.gmra.mxu0 %v89
    %v295 = vpop.f32.mrf.mxu0
    %v296 = vpop.f32.mrf.mxu0
    %v297 = vadd.f32 0.0, %v296
    %v298 = vpop.f32.mrf.mxu0
    %v299 = vpop.f32.mrf.mxu0
    %v300 = vadd.f32 0.0, %v299
    %301 = vmatprep.mubr.bf16.mxu0 0
    %302 = vmatmul.mubr.bf16.gmra.mxu0 %v90
    %v303 = vpop.f32.mrf.mxu0
    %v304 = vpop.f32.mrf.mxu0
    %v305 = vadd.f32 0.0, %v304
    %v306 = vpop.f32.mrf.mxu0
    %v307 = vpop.f32.mrf.mxu0
    %v308 = vadd.f32 0.0, %v307
    %309 = vmatprep.mubr.bf16.mxu0 0
    %310 = vmatmul.mubr.bf16.gmra.mxu0 %v91
    %v311 = vpop.f32.mrf.mxu0
    %v312 = vpop.f32.mrf.mxu0
    %v313 = vadd.f32 0.0, %v312
    %v314 = vpop.f32.mrf.mxu0
    %v315 = vpop.f32.mrf.mxu0
    %v316 = vadd.f32 0.0, %v315
    %317 = vdwg.mxu0
    %318 = vmatprep.subr.bf16.mxu0 0
    %319 = vmatpush1.bf16.msra.mxu0 %v227
    %320 = vmatprep.subr.bf16.mxu0 0
    %321 = vmatpush1.bf16.msra.mxu0 %v224
    %322 = vmatprep.subr.bf16.mxu0 0
    %323 = vmatpush1.bf16.msra.mxu0 %v221
    %324 = vmatprep.subr.bf16.mxu0 0
    %325 = vmatpush1.bf16.msra.mxu0 %v218
    %326 = vmatprep.subr.bf16.mxu0 0
    %327 = vmatpush1.bf16.msra.mxu0 %v215
    %328 = vmatprep.subr.bf16.mxu0 0
    %329 = vmatpush1.bf16.msra.mxu0 %v212
    %330 = vmatprep.subr.bf16.mxu0 0
    %331 = vmatpush1.bf16.msra.mxu0 %v209
    %332 = vmatprep.subr.bf16.mxu0 0
    %333 = vmatpush1.bf16.msra.mxu0 %v206
    %334 = vmatprep.subr.bf16.mxu0 0
    %335 = vmatpush2.bf16.msra.mxu0 0
    %336 = vmatprep.subr.bf16.mxu0 0
    %337 = vmatpush2.bf16.msra.mxu0 0
    %338 = vmatprep.subr.bf16.mxu0 0
    %339 = vmatpush2.bf16.msra.mxu0 0
    %340 = vmatprep.subr.bf16.mxu0 0
    %341 = vmatpush2.bf16.msra.mxu0 0
    %342 = vmatprep.subr.bf16.mxu0 0
    %343 = vmatpush2.bf16.msra.mxu0 0
    %344 = vmatprep.subr.bf16.mxu0 0
    %345 = vmatpush2.bf16.msra.mxu0 0
    %346 = vmatprep.subr.bf16.mxu0 0
    %347 = vmatpush2.bf16.msra.mxu0 0
    %348 = vmatprep.subr.bf16.mxu0 0
    %349 = vmatpush2.bf16.msra.mxu0 0
    %350 = vmatprep.mubr.bf16.mxu0 0
    %351 = vmatmul.mubr.bf16.gmra.mxu0 %v88
    %v352 = vpop.f32.mrf.mxu0
    %v353 = vadd.f32 0.0, %v352
    %v354 = vpop.f32.mrf.mxu0
    %v355 = vpop.f32.mrf.mxu0
    %v356 = vadd.f32 0.0, %v355
    %v357 = vpop.f32.mrf.mxu0
    %358 = vmatprep.mubr.bf16.mxu0 0
    %359 = vmatmul.mubr.bf16.gmra.mxu0 %v89
    %v360 = vpop.f32.mrf.mxu0
    %v361 = vadd.f32 0.0, %v360
    %v362 = vpop.f32.mrf.mxu0
    %v363 = vpop.f32.mrf.mxu0
    %v364 = vadd.f32 0.0, %v363
    %v365 = vpop.f32.mrf.mxu0
    %366 = vmatprep.mubr.bf16.mxu0 0
    %367 = vmatmul.mubr.bf16.gmra.mxu0 %v90
    %v368 = vpop.f32.mrf.mxu0
    %v369 = vadd.f32 0.0, %v368
    %v370 = vpop.f32.mrf.mxu0
    %v371 = vpop.f32.mrf.mxu0
    %v372 = vadd.f32 0.0, %v371
    %v373 = vpop.f32.mrf.mxu0
    %374 = vmatprep.mubr.bf16.mxu0 0
    %375 = vmatmul.mubr.bf16.gmra.mxu0 %v91
    %v376 = vpop.f32.mrf.mxu0
    %v377 = vadd.f32 0.0, %v376
    %v378 = vpop.f32.mrf.mxu0
    %v379 = vpop.f32.mrf.mxu0
    %v380 = vadd.f32 0.0, %v379
    %v381 = vpop.f32.mrf.mxu0
    %382 = vdwg.mxu0
    %v383 = vlaneseq
    %v384 = vshrl.u32 %v383, 7
    %v385 = vsub.s32 0, %v384
    %v386 = vrot.slane %v82, %v385
    %v387 = vadd.f32 %v287, %v386
    %v388 = vlaneseq
    %v389 = vshrl.u32 %v388, 7
    %v390 = vsub.s32 1, %v389
    %v391 = vrot.slane %v82, %v390
    %v392 = vadd.f32 %v289, %v391
    %v393 = vadd.f32 %v292, %v391
    %v394 = vadd.f32 %v297, %v391
    %v395 = vadd.f32 %v300, %v391
    %v396 = vadd.f32 %v305, %v391
    %v397 = vadd.f32 %v308, %v391
    %v398 = vadd.f32 %v313, %v391
    %v399 = vadd.f32 %v316, %v391
    %v400 = vlaneseq
    %v401 = vshrl.u32 %v400, 7
    %v402 = vsub.s32 2, %v401
    %v403 = vrot.slane %v82, %v402
    %v404 = vadd.f32 %v353, %v403
    %v405 = vadd.f32 %v356, %v403
    %v406 = vadd.f32 %v361, %v403
    %v407 = vadd.f32 %v364, %v403
    %v408 = vadd.f32 %v369, %v403
    %v409 = vadd.f32 %v372, %v403
    %v410 = vadd.f32 %v377, %v403
    %v411 = vadd.f32 %v380, %v403
    %vm412 = vcmask 261120
    %v414 = vsel %vm412, %v387, 0
    %v417 = vsel %vm412, %v392, 0
    %v420 = vsel %vm412, %v393, 0
    %v423 = vsel %vm412, %v394, 0
    %v426 = vsel %vm412, %v395, 0
    %v429 = vsel %vm412, %v396, 0
    %v432 = vsel %vm412, %v397, 0
    %v435 = vsel %vm412, %v398, 0
    %v438 = vsel %vm412, %v399, 0
    %440 = vmatprep.subr.mxu0 0.0
    %441 = vmatpush1.xpose.msra.mxu0 0.0
    %442 = vmatprep.subr.mxu0 0.0
    %443 = vmatpush1.xpose.msra.mxu0 0.0
    %444 = vmatprep.subr.mxu0 0.0
    %445 = vmatpush1.xpose.msra.mxu0 0.0
    %446 = vmatprep.subr.mxu0 0.0
    %447 = vmatpush1.xpose.msra.mxu0 0.0
    %448 = vmatprep.subr.mxu0 0.0
    %449 = vmatpush1.xpose.msra.mxu0 0.0
    %450 = vmatprep.subr.mxu0 0.0
    %451 = vmatpush1.xpose.msra.mxu0 0.0
    %452 = vmatprep.subr.mxu0 0.0
    %453 = vmatpush1.xpose.msra.mxu0 0.0
    %454 = vmatprep.subr.mxu0 0.0
    %455 = vmatpush1.xpose.msra.mxu0 0.0
    %456 = vmatprep.subr.mxu0 0.0
    %457 = vmatpush1.xpose.msra.mxu0 %v438
    %458 = vmatprep.subr.mxu0 0.0
    %459 = vmatpush1.xpose.msra.mxu0 %v435
    %460 = vmatprep.subr.mxu0 0.0
    %461 = vmatpush1.xpose.msra.mxu0 %v432
    %462 = vmatprep.subr.mxu0 0.0
    %463 = vmatpush1.xpose.msra.mxu0 %v429
    %464 = vmatprep.subr.mxu0 0.0
    %465 = vmatpush1.xpose.msra.mxu0 %v426
    %466 = vmatprep.subr.mxu0 0.0
    %467 = vmatpush1.xpose.msra.mxu0 %v423
    %468 = vmatprep.subr.mxu0 0.0
    %469 = vmatpush1.xpose.msra.mxu0 %v420
    %470 = vmatprep.subr.mxu0 0.0
    %471 = vmatpush1.xpose.msra.mxu0 %v417
    %472 = vmatprep.subr.mxu0 0.0
    %473 = vmatpush2.xpose.msra.mxu0 0.0
    %474 = vmatprep.subr.mxu0 0.0
    %475 = vmatpush2.xpose.msra.mxu0 0.0
    %476 = vmatprep.subr.mxu0 0.0
    %477 = vmatpush2.xpose.msra.mxu0 0.0
    %478 = vmatprep.subr.mxu0 0.0
    %479 = vmatpush2.xpose.msra.mxu0 0.0
    %480 = vmatprep.subr.mxu0 0.0
    %481 = vmatpush2.xpose.msra.mxu0 0.0
    %482 = vmatprep.subr.mxu0 0.0
    %483 = vmatpush2.xpose.msra.mxu0 0.0
    %484 = vmatprep.subr.mxu0 0.0
    %485 = vmatpush2.xpose.msra.mxu0 0.0
    %486 = vmatprep.subr.mxu0 0.0
    %487 = vmatpush2.xpose.msra.mxu0 0.0
    %488 = vmatprep.subr.mxu0 0.0
    %489 = vmatpush2.xpose.msra.mxu0 0.0
    %490 = vmatprep.subr.mxu0 0.0
    %491 = vmatpush2.xpose.msra.mxu0 0.0
    %492 = vmatprep.subr.mxu0 0.0
    %493 = vmatpush2.xpose.msra.mxu0 0.0
    %494 = vmatprep.subr.mxu0 0.0
    %495 = vmatpush2.xpose.msra.mxu0 0.0
    %496 = vmatprep.subr.mxu0 0.0
    %497 = vmatpush2.xpose.msra.mxu0 0.0
    %498 = vmatprep.subr.mxu0 0.0
    %499 = vmatpush2.xpose.msra.mxu0 0.0
    %500 = vmatprep.subr.mxu0 0.0
    %501 = vmatpush2.xpose.msra.mxu0 0.0
    %502 = vmatprep.subr.mxu0 0.0
    %503 = vmatpush2.xpose.msra.mxu0 0.0
    %504 = vmatprep.mubr.f32.mxu0 0.0
    %505 = vmatmul.mubr.f32.gmra.mxu0 %v414
    %v506 = vpop.f32.mrf.mxu0
    %v507 = vadd.f32 0.0, %v506
    %v508 = vpop.f32.mrf.mxu0
    %509 = vdwg.mxu0
    %v510 = vmul.f32 %v507, 0.17677669
    %v511 = vadd.f32 %v510, %v85
    %vm512 = vcmask 523264
    %v513 = vsel %vm512, %v511, -inf
    %514 = vmax.xlane.f32.xlu0 %v513
    %v515 = vpop.xlane.xlu0 %514
    %v516 = vsub.f32 %v511, %v515
    %v517 = vmul.f32 %v516, 1.442695
    %v518 = vpow.pop %v517
    %v519 = vsel %vm512, %v518, 0.0
    %520 = vadd.xlane.f32.xlu0 %v519
    %v521 = vpop.xlane.xlu0 %520
    %v522 = vrcp.pop %v521
    %v523 = vmul.f32 %v518, %v522
    %v525 = vsel %vm512, %v523, 0
    %527 = vmatprep.subr.mxu0 0.0
    %528 = vmatpush1.msra.mxu0 0.0
    %529 = vmatprep.subr.mxu0 0.0
    %530 = vmatpush1.msra.mxu0 0.0
    %531 = vmatprep.subr.mxu0 0.0
    %532 = vmatpush1.msra.mxu0 0.0
    %533 = vmatprep.subr.mxu0 0.0
    %534 = vmatpush1.msra.mxu0 0.0
    %535 = vmatprep.subr.mxu0 0.0
    %536 = vmatpush1.msra.mxu0 0.0
    %537 = vmatprep.subr.mxu0 0.0
    %538 = vmatpush1.msra.mxu0 0.0
    %539 = vmatprep.subr.mxu0 0.0
    %540 = vmatpush1.msra.mxu0 0.0
    %541 = vmatprep.subr.mxu0 0.0
    %542 = vmatpush1.msra.mxu0 0.0
    %543 = vmatprep.subr.mxu0 0.0
    %544 = vmatpush1.msra.mxu0 %v411
    %545 = vmatprep.subr.mxu0 0.0
    %546 = vmatpush1.msra.mxu0 %v410
    %547 = vmatprep.subr.mxu0 0.0
    %548 = vmatpush1.msra.mxu0 %v409
    %549 = vmatprep.subr.mxu0 0.0
    %550 = vmatpush1.msra.mxu0 %v408
    %551 = vmatprep.subr.mxu0 0.0
    %552 = vmatpush1.msra.mxu0 %v407
    %553 = vmatprep.subr.mxu0 0.0
    %554 = vmatpush1.msra.mxu0 %v406
    %555 = vmatprep.subr.mxu0 0.0
    %556 = vmatpush1.msra.mxu0 %v405
    %557 = vmatprep.subr.mxu0 0.0
    %558 = vmatpush1.msra.mxu0 %v404
    %559 = vmatprep.subr.mxu0 0.0
    %560 = vmatpush2.msra.mxu0 0.0
    %561 = vmatprep.subr.mxu0 0.0
    %562 = vmatpush2.msra.mxu0 0.0
    %563 = vmatprep.subr.mxu0 0.0
    %564 = vmatpush2.msra.mxu0 0.0
    %565 = vmatprep.subr.mxu0 0.0
    %566 = vmatpush2.msra.mxu0 0.0
    %567 = vmatprep.subr.mxu0 0.0
    %568 = vmatpush2.msra.mxu0 0.0
    %569 = vmatprep.subr.mxu0 0.0
    %570 = vmatpush2.msra.mxu0 0.0
    %571 = vmatprep.subr.mxu0 0.0
    %572 = vmatpush2.msra.mxu0 0.0
    %573 = vmatprep.subr.mxu0 0.0
    %574 = vmatpush2.msra.mxu0 0.0
    %575 = vmatprep.subr.mxu0 0.0
    %576 = vmatpush2.msra.mxu0 0.0
    %577 = vmatprep.subr.mxu0 0.0
    %578 = vmatpush2.msra.mxu0 0.0
    %579 = vmatprep.subr.mxu0 0.0
    %580 = vmatpush2.msra.mxu0 0.0
    %581 = vmatprep.subr.mxu0 0.0
    %582 = vmatpush2.msra.mxu0 0.0
    %583 = vmatprep.subr.mxu0 0.0
    %584 = vmatpush2.msra.mxu0 0.0
    %585 = vmatprep.subr.mxu0 0.0
    %586 = vmatpush2.msra.mxu0 0.0
    %587 = vmatprep.subr.mxu0 0.0
    %588 = vmatpush2.msra.mxu0 0.0
    %589 = vmatprep.subr.mxu0 0.0
    %590 = vmatpush2.msra.mxu0 0.0
    %591 = vmatprep.mubr.f32.mxu0 0.0
    %592 = vmatmul.mubr.f32.gmra.mxu0 %v525
    %v593 = vpop.f32.mrf.mxu0
    %v594 = vadd.f32 0.0, %v593
    %v595 = vpop.f32.mrf.mxu0
    %596 = vdwg.mxu0
    %597 = vrot.lane.b32.xlu0 %v387, 96
    %v598 = vpop.permute.xlu0 %597
    %599 = vrot.lane.b32.xlu0 %v392, 96
    %v600 = vpop.permute.xlu0 %599
    %601 = vrot.lane.b32.xlu0 %v393, 96
    %v602 = vpop.permute.xlu0 %601
    %603 = vrot.lane.b32.xlu0 %v394, 96
    %v604 = vpop.permute.xlu0 %603
    %605 = vrot.lane.b32.xlu0 %v395, 96
    %v606 = vpop.permute.xlu0 %605
    %607 = vrot.lane.b32.xlu0 %v396, 96
    %v608 = vpop.permute.xlu0 %607
    %609 = vrot.lane.b32.xlu0 %v397, 96
    %v610 = vpop.permute.xlu0 %609
    %611 = vrot.lane.b32.xlu0 %v398, 96
    %v612 = vpop.permute.xlu0 %611
    %613 = vrot.lane.b32.xlu0 %v399, 96
    %v614 = vpop.permute.xlu0 %613
    %v615 = vsel %vm412, %v598, 0
    %v617 = vsel %vm412, %v600, 0
    %v619 = vsel %vm412, %v602, 0
    %v621 = vsel %vm412, %v604, 0
    %v623 = vsel %vm412, %v606, 0
    %v625 = vsel %vm412, %v608, 0
    %v627 = vsel %vm412, %v610, 0
    %v629 = vsel %vm412, %v612, 0
    %v631 = vsel %vm412, %v614, 0
    %633 = vmatprep.subr.mxu0 0.0
    %634 = vmatpush1.xpose.msra.mxu0 0.0
    %635 = vmatprep.subr.mxu0 0.0
    %636 = vmatpush1.xpose.msra.mxu0 0.0
    %637 = vmatprep.subr.mxu0 0.0
    %638 = vmatpush1.xpose.msra.mxu0 0.0
    %639 = vmatprep.subr.mxu0 0.0
    %640 = vmatpush1.xpose.msra.mxu0 0.0
    %641 = vmatprep.subr.mxu0 0.0
    %642 = vmatpush1.xpose.msra.mxu0 0.0
    %643 = vmatprep.subr.mxu0 0.0
    %644 = vmatpush1.xpose.msra.mxu0 0.0
    %645 = vmatprep.subr.mxu0 0.0
    %646 = vmatpush1.xpose.msra.mxu0 0.0
    %647 = vmatprep.subr.mxu0 0.0
    %648 = vmatpush1.xpose.msra.mxu0 0.0
    %649 = vmatprep.subr.mxu0 0.0
    %650 = vmatpush1.xpose.msra.mxu0 %v631
    %651 = vmatprep.subr.mxu0 0.0
    %652 = vmatpush1.xpose.msra.mxu0 %v629
    %653 = vmatprep.subr.mxu0 0.0
    %654 = vmatpush1.xpose.msra.mxu0 %v627
    %655 = vmatprep.subr.mxu0 0.0
    %656 = vmatpush1.xpose.msra.mxu0 %v625
    %657 = vmatprep.subr.mxu0 0.0
    %658 = vmatpush1.xpose.msra.mxu0 %v623
    %659 = vmatprep.subr.mxu0 0.0
    %660 = vmatpush1.xpose.msra.mxu0 %v621
    %661 = vmatprep.subr.mxu0 0.0
    %662 = vmatpush1.xpose.msra.mxu0 %v619
    %663 = vmatprep.subr.mxu0 0.0
    %664 = vmatpush1.xpose.msra.mxu0 %v617
    %665 = vmatprep.subr.mxu0 0.0
    %666 = vmatpush2.xpose.msra.mxu0 0.0
    %667 = vmatprep.subr.mxu0 0.0
    %668 = vmatpush2.xpose.msra.mxu0 0.0
    %669 = vmatprep.subr.mxu0 0.0
    %670 = vmatpush2.xpose.msra.mxu0 0.0
    %671 = vmatprep.subr.mxu0 0.0
    %672 = vmatpush2.xpose.msra.mxu0 0.0
    %673 = vmatprep.subr.mxu0 0.0
    %674 = vmatpush2.xpose.msra.mxu0 0.0
    %675 = vmatprep.subr.mxu0 0.0
    %676 = vmatpush2.xpose.msra.mxu0 0.0
    %677 = vmatprep.subr.mxu0 0.0
    %678 = vmatpush2.xpose.msra.mxu0 0.0
    %679 = vmatprep.subr.mxu0 0.0
    %680 = vmatpush2.xpose.msra.mxu0 0.0
    %681 = vmatprep.subr.mxu0 0.0
    %682 = vmatpush2.xpose.msra.mxu0 0.0
    %683 = vmatprep.subr.mxu0 0.0
    %684 = vmatpush2.xpose.msra.mxu0 0.0
    %685 = vmatprep.subr.mxu0 0.0
    %686 = vmatpush2.xpose.msra.mxu0 0.0
    %687 = vmatprep.subr.mxu0 0.0
    %688 = vmatpush2.xpose.msra.mxu0 0.0
    %689 = vmatprep.subr.mxu0 0.0
    %690 = vmatpush2.xpose.msra.mxu0 0.0
    %691 = vmatprep.subr.mxu0 0.0
    %692 = vmatpush2.xpose.msra.mxu0 0.0
    %693 = vmatprep.subr.mxu0 0.0
    %694 = vmatpush2.xpose.msra.mxu0 0.0
    %695 = vmatprep.subr.mxu0 0.0
    %696 = vmatpush2.xpose.msra.mxu0 0.0
    %697 = vmatprep.mubr.f32.mxu0 0.0
    %698 = vmatmul.mubr.f32.gmra.mxu0 %v615
    %v699 = vpop.f32.mrf.mxu0
    %v700 = vadd.f32 0.0, %v699
    %v701 = vpop.f32.mrf.mxu0
    %702 = vdwg.mxu0
    %v703 = vmul.f32 %v700, 0.17677669
    %v704 = vadd.f32 %v703, %v85
    %v705 = vsel %vm512, %v704, -inf
    %706 = vmax.xlane.f32.xlu0 %v705
    %v707 = vpop.xlane.xlu0 %706
    %v708 = vsub.f32 %v704, %v707
    %v709 = vmul.f32 %v708, 1.442695
    %v710 = vpow.pop %v709
    %v711 = vsel %vm512, %v710, 0.0
    %712 = vadd.xlane.f32.xlu0 %v711
    %v713 = vpop.xlane.xlu0 %712
    %v714 = vrcp.pop %v713
    %v715 = vmul.f32 %v710, %v714
    %724 = vrot.lane.b32.xlu0 %v404, 96
    %v725 = vpop.permute.xlu0 %724
    %726 = vrot.lane.b32.xlu0 %v405, 96
    %v727 = vpop.permute.xlu0 %726
    %728 = vrot.lane.b32.xlu0 %v406, 96
    %v729 = vpop.permute.xlu0 %728
    %730 = vrot.lane.b32.xlu0 %v407, 96
    %v731 = vpop.permute.xlu0 %730
    %732 = vrot.lane.b32.xlu0 %v408, 96
    %v733 = vpop.permute.xlu0 %732
    %734 = vrot.lane.b32.xlu0 %v409, 96
    %v735 = vpop.permute.xlu0 %734
    %736 = vrot.lane.b32.xlu0 %v410, 96
    %v737 = vpop.permute.xlu0 %736
    %738 = vrot.lane.b32.xlu0 %v411, 96
    %v739 = vpop.permute.xlu0 %738
    %v749 = vsel %vm512, %v715, 0
    %751 = vmatprep.subr.mxu0 0.0
    %752 = vmatpush1.msra.mxu0 0.0
    %753 = vmatprep.subr.mxu0 0.0
    %754 = vmatpush1.msra.mxu0 0.0
    %755 = vmatprep.subr.mxu0 0.0
    %756 = vmatpush1.msra.mxu0 0.0
    %757 = vmatprep.subr.mxu0 0.0
    %758 = vmatpush1.msra.mxu0 0.0
    %759 = vmatprep.subr.mxu0 0.0
    %760 = vmatpush1.msra.mxu0 0.0
    %761 = vmatprep.subr.mxu0 0.0
    %762 = vmatpush1.msra.mxu0 0.0
    %763 = vmatprep.subr.mxu0 0.0
    %764 = vmatpush1.msra.mxu0 0.0
    %765 = vmatprep.subr.mxu0 0.0
    %766 = vmatpush1.msra.mxu0 0.0
    %767 = vmatprep.subr.mxu0 0.0
    %768 = vmatpush1.msra.mxu0 %v739
    %769 = vmatprep.subr.mxu0 0.0
    %770 = vmatpush1.msra.mxu0 %v737
    %771 = vmatprep.subr.mxu0 0.0
    %772 = vmatpush1.msra.mxu0 %v735
    %773 = vmatprep.subr.mxu0 0.0
    %774 = vmatpush1.msra.mxu0 %v733
    %775 = vmatprep.subr.mxu0 0.0
    %776 = vmatpush1.msra.mxu0 %v731
    %777 = vmatprep.subr.mxu0 0.0
    %778 = vmatpush1.msra.mxu0 %v729
    %779 = vmatprep.subr.mxu0 0.0
    %780 = vmatpush1.msra.mxu0 %v727
    %781 = vmatprep.subr.mxu0 0.0
    %782 = vmatpush1.msra.mxu0 %v725
    %783 = vmatprep.subr.mxu0 0.0
    %784 = vmatpush2.msra.mxu0 0.0
    %785 = vmatprep.subr.mxu0 0.0
    %786 = vmatpush2.msra.mxu0 0.0
    %787 = vmatprep.subr.mxu0 0.0
    %788 = vmatpush2.msra.mxu0 0.0
    %789 = vmatprep.subr.mxu0 0.0
    %790 = vmatpush2.msra.mxu0 0.0
    %791 = vmatprep.subr.mxu0 0.0
    %792 = vmatpush2.msra.mxu0 0.0
    %793 = vmatprep.subr.mxu0 0.0
    %794 = vmatpush2.msra.mxu0 0.0
    %795 = vmatprep.subr.mxu0 0.0
    %796 = vmatpush2.msra.mxu0 0.0
    %797 = vmatprep.subr.mxu0 0.0
    %798 = vmatpush2.msra.mxu0 0.0
    %799 = vmatprep.subr.mxu0 0.0
    %800 = vmatpush2.msra.mxu0 0.0
    %801 = vmatprep.subr.mxu0 0.0
    %802 = vmatpush2.msra.mxu0 0.0
    %803 = vmatprep.subr.mxu0 0.0
    %804 = vmatpush2.msra.mxu0 0.0
    %805 = vmatprep.subr.mxu0 0.0
    %806 = vmatpush2.msra.mxu0 0.0
    %807 = vmatprep.subr.mxu0 0.0
    %808 = vmatpush2.msra.mxu0 0.0
    %809 = vmatprep.subr.mxu0 0.0
    %810 = vmatpush2.msra.mxu0 0.0
    %811 = vmatprep.subr.mxu0 0.0
    %812 = vmatpush2.msra.mxu0 0.0
    %813 = vmatprep.subr.mxu0 0.0
    %814 = vmatpush2.msra.mxu0 0.0
    %815 = vmatprep.mubr.f32.mxu0 0.0
    %816 = vmatmul.mubr.f32.gmra.mxu0 %v749
    %v817 = vpop.f32.mrf.mxu0
    %v818 = vadd.f32 0.0, %v817
    %v819 = vpop.f32.mrf.mxu0
    %820 = vdwg.mxu0
    %821 = vrot.lane.b32.xlu0 %v387, 64
    %v822 = vpop.permute.xlu0 %821
    %823 = vrot.lane.b32.xlu0 %v392, 64
    %v824 = vpop.permute.xlu0 %823
    %825 = vrot.lane.b32.xlu0 %v393, 64
    %v826 = vpop.permute.xlu0 %825
    %827 = vrot.lane.b32.xlu0 %v394, 64
    %v828 = vpop.permute.xlu0 %827
    %829 = vrot.lane.b32.xlu0 %v395, 64
    %v830 = vpop.permute.xlu0 %829
    %831 = vrot.lane.b32.xlu0 %v396, 64
    %v832 = vpop.permute.xlu0 %831
    %833 = vrot.lane.b32.xlu0 %v397, 64
    %v834 = vpop.permute.xlu0 %833
    %835 = vrot.lane.b32.xlu0 %v398, 64
    %v836 = vpop.permute.xlu0 %835
    %837 = vrot.lane.b32.xlu0 %v399, 64
    %v838 = vpop.permute.xlu0 %837
    %v839 = vsel %vm412, %v822, 0
    %v841 = vsel %vm412, %v824, 0
    %v843 = vsel %vm412, %v826, 0
    %v845 = vsel %vm412, %v828, 0
    %v847 = vsel %vm412, %v830, 0
    %v849 = vsel %vm412, %v832, 0
    %v851 = vsel %vm412, %v834, 0
    %v853 = vsel %vm412, %v836, 0
    %v855 = vsel %vm412, %v838, 0
    %857 = vmatprep.subr.mxu0 0.0
    %858 = vmatpush1.xpose.msra.mxu0 0.0
    %859 = vmatprep.subr.mxu0 0.0
    %860 = vmatpush1.xpose.msra.mxu0 0.0
    %861 = vmatprep.subr.mxu0 0.0
    %862 = vmatpush1.xpose.msra.mxu0 0.0
    %863 = vmatprep.subr.mxu0 0.0
    %864 = vmatpush1.xpose.msra.mxu0 0.0
    %865 = vmatprep.subr.mxu0 0.0
    %866 = vmatpush1.xpose.msra.mxu0 0.0
    %867 = vmatprep.subr.mxu0 0.0
    %868 = vmatpush1.xpose.msra.mxu0 0.0
    %869 = vmatprep.subr.mxu0 0.0
    %870 = vmatpush1.xpose.msra.mxu0 0.0
    %871 = vmatprep.subr.mxu0 0.0
    %872 = vmatpush1.xpose.msra.mxu0 0.0
    %873 = vmatprep.subr.mxu0 0.0
    %874 = vmatpush1.xpose.msra.mxu0 %v855
    %875 = vmatprep.subr.mxu0 0.0
    %876 = vmatpush1.xpose.msra.mxu0 %v853
    %877 = vmatprep.subr.mxu0 0.0
    %878 = vmatpush1.xpose.msra.mxu0 %v851
    %879 = vmatprep.subr.mxu0 0.0
    %880 = vmatpush1.xpose.msra.mxu0 %v849
    %881 = vmatprep.subr.mxu0 0.0
    %882 = vmatpush1.xpose.msra.mxu0 %v847
    %883 = vmatprep.subr.mxu0 0.0
    %884 = vmatpush1.xpose.msra.mxu0 %v845
    %885 = vmatprep.subr.mxu0 0.0
    %886 = vmatpush1.xpose.msra.mxu0 %v843
    %887 = vmatprep.subr.mxu0 0.0
    %888 = vmatpush1.xpose.msra.mxu0 %v841
    %889 = vmatprep.subr.mxu0 0.0
    %890 = vmatpush2.xpose.msra.mxu0 0.0
    %891 = vmatprep.subr.mxu0 0.0
    %892 = vmatpush2.xpose.msra.mxu0 0.0
    %893 = vmatprep.subr.mxu0 0.0
    %894 = vmatpush2.xpose.msra.mxu0 0.0
    %895 = vmatprep.subr.mxu0 0.0
    %896 = vmatpush2.xpose.msra.mxu0 0.0
    %897 = vmatprep.subr.mxu0 0.0
    %898 = vmatpush2.xpose.msra.mxu0 0.0
    %899 = vmatprep.subr.mxu0 0.0
    %900 = vmatpush2.xpose.msra.mxu0 0.0
    %901 = vmatprep.subr.mxu0 0.0
    %902 = vmatpush2.xpose.msra.mxu0 0.0
    %903 = vmatprep.subr.mxu0 0.0
    %904 = vmatpush2.xpose.msra.mxu0 0.0
    %905 = vmatprep.subr.mxu0 0.0
    %906 = vmatpush2.xpose.msra.mxu0 0.0
    %907 = vmatprep.subr.mxu0 0.0
    %908 = vmatpush2.xpose.msra.mxu0 0.0
    %909 = vmatprep.subr.mxu0 0.0
    %910 = vmatpush2.xpose.msra.mxu0 0.0
    %911 = vmatprep.subr.mxu0 0.0
    %912 = vmatpush2.xpose.msra.mxu0 0.0
    %913 = vmatprep.subr.mxu0 0.0
    %914 = vmatpush2.xpose.msra.mxu0 0.0
    %915 = vmatprep.subr.mxu0 0.0
    %916 = vmatpush2.xpose.msra.mxu0 0.0
    %917 = vmatprep.subr.mxu0 0.0
    %918 = vmatpush2.xpose.msra.mxu0 0.0
    %919 = vmatprep.subr.mxu0 0.0
    %920 = vmatpush2.xpose.msra.mxu0 0.0
    %921 = vmatprep.mubr.f32.mxu0 0.0
    %922 = vmatmul.mubr.f32.gmra.mxu0 %v839
    %v923 = vpop.f32.mrf.mxu0
    %v924 = vadd.f32 0.0, %v923
    %v925 = vpop.f32.mrf.mxu0
    %926 = vdwg.mxu0
    %v927 = vmul.f32 %v924, 0.17677669
    %v928 = vadd.f32 %v927, %v85
    %v929 = vsel %vm512, %v928, -inf
    %930 = vmax.xlane.f32.xlu0 %v929
    %v931 = vpop.xlane.xlu0 %930
    %v932 = vsub.f32 %v928, %v931
    %v933 = vmul.f32 %v932, 1.442695
    %v934 = vpow.pop %v933
    %v935 = vsel %vm512, %v934, 0.0
    %936 = vadd.xlane.f32.xlu0 %v935
    %v937 = vpop.xlane.xlu0 %936
    %v938 = vrcp.pop %v937
    %v939 = vmul.f32 %v934, %v938
    %940 = vrot.lane.b32.xlu0 %v404, 64
    %v941 = vpop.permute.xlu0 %940
    %942 = vrot.lane.b32.xlu0 %v405, 64
    %v943 = vpop.permute.xlu0 %942
    %944 = vrot.lane.b32.xlu0 %v406, 64
    %v945 = vpop.permute.xlu0 %944
    %946 = vrot.lane.b32.xlu0 %v407, 64
    %v947 = vpop.permute.xlu0 %946
    %948 = vrot.lane.b32.xlu0 %v408, 64
    %v949 = vpop.permute.xlu0 %948
    %950 = vrot.lane.b32.xlu0 %v409, 64
    %v951 = vpop.permute.xlu0 %950
    %952 = vrot.lane.b32.xlu0 %v410, 64
    %v953 = vpop.permute.xlu0 %952
    %954 = vrot.lane.b32.xlu0 %v411, 64
    %v955 = vpop.permute.xlu0 %954
    %v965 = vsel %vm512, %v939, 0
    %967 = vmatprep.subr.mxu0 0.0
    %968 = vmatpush1.msra.mxu0 0.0
    %969 = vmatprep.subr.mxu0 0.0
    %970 = vmatpush1.msra.mxu0 0.0
    %971 = vmatprep.subr.mxu0 0.0
    %972 = vmatpush1.msra.mxu0 0.0
    %973 = vmatprep.subr.mxu0 0.0
    %974 = vmatpush1.msra.mxu0 0.0
    %975 = vmatprep.subr.mxu0 0.0
    %976 = vmatpush1.msra.mxu0 0.0
    %977 = vmatprep.subr.mxu0 0.0
    %978 = vmatpush1.msra.mxu0 0.0
    %979 = vmatprep.subr.mxu0 0.0
    %980 = vmatpush1.msra.mxu0 0.0
    %981 = vmatprep.subr.mxu0 0.0
    %982 = vmatpush1.msra.mxu0 0.0
    %983 = vmatprep.subr.mxu0 0.0
    %984 = vmatpush1.msra.mxu0 %v955
    %985 = vmatprep.subr.mxu0 0.0
    %986 = vmatpush1.msra.mxu0 %v953
    %987 = vmatprep.subr.mxu0 0.0
    %988 = vmatpush1.msra.mxu0 %v951
    %989 = vmatprep.subr.mxu0 0.0
    %990 = vmatpush1.msra.mxu0 %v949
    %991 = vmatprep.subr.mxu0 0.0
    %992 = vmatpush1.msra.mxu0 %v947
    %993 = vmatprep.subr.mxu0 0.0
    %994 = vmatpush1.msra.mxu0 %v945
    %995 = vmatprep.subr.mxu0 0.0
    %996 = vmatpush1.msra.mxu0 %v943
    %997 = vmatprep.subr.mxu0 0.0
    %998 = vmatpush1.msra.mxu0 %v941
    %999 = vmatprep.subr.mxu0 0.0
    %1000 = vmatpush2.msra.mxu0 0.0
    %1001 = vmatprep.subr.mxu0 0.0
    %1002 = vmatpush2.msra.mxu0 0.0
    %1003 = vmatprep.subr.mxu0 0.0
    %1004 = vmatpush2.msra.mxu0 0.0
    %1005 = vmatprep.subr.mxu0 0.0
    %1006 = vmatpush2.msra.mxu0 0.0
    %1007 = vmatprep.subr.mxu0 0.0
    %1008 = vmatpush2.msra.mxu0 0.0
    %1009 = vmatprep.subr.mxu0 0.0
    %1010 = vmatpush2.msra.mxu0 0.0
    %1011 = vmatprep.subr.mxu0 0.0
    %1012 = vmatpush2.msra.mxu0 0.0
    %1013 = vmatprep.subr.mxu0 0.0
    %1014 = vmatpush2.msra.mxu0 0.0
    %1015 = vmatprep.subr.mxu0 0.0
    %1016 = vmatpush2.msra.mxu0 0.0
    %1017 = vmatprep.subr.mxu0 0.0
    %1018 = vmatpush2.msra.mxu0 0.0
    %1019 = vmatprep.subr.mxu0 0.0
    %1020 = vmatpush2.msra.mxu0 0.0
    %1021 = vmatprep.subr.mxu0 0.0
    %1022 = vmatpush2.msra.mxu0 0.0
    %1023 = vmatprep.subr.mxu0 0.0
    %1024 = vmatpush2.msra.mxu0 0.0
    %1025 = vmatprep.subr.mxu0 0.0
    %1026 = vmatpush2.msra.mxu0 0.0
    %1027 = vmatprep.subr.mxu0 0.0
    %1028 = vmatpush2.msra.mxu0 0.0
    %1029 = vmatprep.subr.mxu0 0.0
    %1030 = vmatpush2.msra.mxu0 0.0
    %1031 = vmatprep.mubr.f32.mxu0 0.0
    %1032 = vmatmul.mubr.f32.gmra.mxu0 %v965
    %v1033 = vpop.f32.mrf.mxu0
    %v1034 = vadd.f32 0.0, %v1033
    %v1035 = vpop.f32.mrf.mxu0
    %1036 = vdwg.mxu0
    %1037 = vrot.lane.b32.xlu0 %v387, 32
    %v1038 = vpop.permute.xlu0 %1037
    %1039 = vrot.lane.b32.xlu0 %v392, 32
    %v1040 = vpop.permute.xlu0 %1039
    %1041 = vrot.lane.b32.xlu0 %v393, 32
    %v1042 = vpop.permute.xlu0 %1041
    %1043 = vrot.lane.b32.xlu0 %v394, 32
    %v1044 = vpop.permute.xlu0 %1043
    %1045 = vrot.lane.b32.xlu0 %v395, 32
    %v1046 = vpop.permute.xlu0 %1045
    %1047 = vrot.lane.b32.xlu0 %v396, 32
    %v1048 = vpop.permute.xlu0 %1047
    %1049 = vrot.lane.b32.xlu0 %v397, 32
    %v1050 = vpop.permute.xlu0 %1049
    %1051 = vrot.lane.b32.xlu0 %v398, 32
    %v1052 = vpop.permute.xlu0 %1051
    %1053 = vrot.lane.b32.xlu0 %v399, 32
    %v1054 = vpop.permute.xlu0 %1053
    %v1055 = vsel %vm412, %v1038, 0
    %v1057 = vsel %vm412, %v1040, 0
    %v1059 = vsel %vm412, %v1042, 0
    %v1061 = vsel %vm412, %v1044, 0
    %v1063 = vsel %vm412, %v1046, 0
    %v1065 = vsel %vm412, %v1048, 0
    %v1067 = vsel %vm412, %v1050, 0
    %v1069 = vsel %vm412, %v1052, 0
    %v1071 = vsel %vm412, %v1054, 0
    %1073 = vmatprep.subr.mxu0 0.0
    %1074 = vmatpush1.xpose.msra.mxu0 0.0
    %1075 = vmatprep.subr.mxu0 0.0
    %1076 = vmatpush1.xpose.msra.mxu0 0.0
    %1077 = vmatprep.subr.mxu0 0.0
    %1078 = vmatpush1.xpose.msra.mxu0 0.0
    %1079 = vmatprep.subr.mxu0 0.0
    %1080 = vmatpush1.xpose.msra.mxu0 0.0
    %1081 = vmatprep.subr.mxu0 0.0
    %1082 = vmatpush1.xpose.msra.mxu0 0.0
    %1083 = vmatprep.subr.mxu0 0.0
    %1084 = vmatpush1.xpose.msra.mxu0 0.0
    %1085 = vmatprep.subr.mxu0 0.0
    %1086 = vmatpush1.xpose.msra.mxu0 0.0
    %1087 = vmatprep.subr.mxu0 0.0
    %1088 = vmatpush1.xpose.msra.mxu0 0.0
    %1089 = vmatprep.subr.mxu0 0.0
    %1090 = vmatpush1.xpose.msra.mxu0 %v1071
    %1091 = vmatprep.subr.mxu0 0.0
    %1092 = vmatpush1.xpose.msra.mxu0 %v1069
    %1093 = vmatprep.subr.mxu0 0.0
    %1094 = vmatpush1.xpose.msra.mxu0 %v1067
    %1095 = vmatprep.subr.mxu0 0.0
    %1096 = vmatpush1.xpose.msra.mxu0 %v1065
    %1097 = vmatprep.subr.mxu0 0.0
    %1098 = vmatpush1.xpose.msra.mxu0 %v1063
    %1099 = vmatprep.subr.mxu0 0.0
    %1100 = vmatpush1.xpose.msra.mxu0 %v1061
    %1101 = vmatprep.subr.mxu0 0.0
    %1102 = vmatpush1.xpose.msra.mxu0 %v1059
    %1103 = vmatprep.subr.mxu0 0.0
    %1104 = vmatpush1.xpose.msra.mxu0 %v1057
    %1105 = vmatprep.subr.mxu0 0.0
    %1106 = vmatpush2.xpose.msra.mxu0 0.0
    %1107 = vmatprep.subr.mxu0 0.0
    %1108 = vmatpush2.xpose.msra.mxu0 0.0
    %1109 = vmatprep.subr.mxu0 0.0
    %1110 = vmatpush2.xpose.msra.mxu0 0.0
    %1111 = vmatprep.subr.mxu0 0.0
    %1112 = vmatpush2.xpose.msra.mxu0 0.0
    %1113 = vmatprep.subr.mxu0 0.0
    %1114 = vmatpush2.xpose.msra.mxu0 0.0
    %1115 = vmatprep.subr.mxu0 0.0
    %1116 = vmatpush2.xpose.msra.mxu0 0.0
    %1117 = vmatprep.subr.mxu0 0.0
    %1118 = vmatpush2.xpose.msra.mxu0 0.0
    %1119 = vmatprep.subr.mxu0 0.0
    %1120 = vmatpush2.xpose.msra.mxu0 0.0
    %1121 = vmatprep.subr.mxu0 0.0
    %1122 = vmatpush2.xpose.msra.mxu0 0.0
    %1123 = vmatprep.subr.mxu0 0.0
    %1124 = vmatpush2.xpose.msra.mxu0 0.0
    %1125 = vmatprep.subr.mxu0 0.0
    %1126 = vmatpush2.xpose.msra.mxu0 0.0
    %1127 = vmatprep.subr.mxu0 0.0
    %1128 = vmatpush2.xpose.msra.mxu0 0.0
    %1129 = vmatprep.subr.mxu0 0.0
    %1130 = vmatpush2.xpose.msra.mxu0 0.0
    %1131 = vmatprep.subr.mxu0 0.0
    %1132 = vmatpush2.xpose.msra.mxu0 0.0
    %1133 = vmatprep.subr.mxu0 0.0
    %1134 = vmatpush2.xpose.msra.mxu0 0.0
    %1135 = vmatprep.subr.mxu0 0.0
    %1136 = vmatpush2.xpose.msra.mxu0 0.0
    %1137 = vmatprep.mubr.f32.mxu0 0.0
    %1138 = vmatmul.mubr.f32.gmra.mxu0 %v1055
    %v1139 = vpop.f32.mrf.mxu0
    %v1140 = vadd.f32 0.0, %v1139
    %v1141 = vpop.f32.mrf.mxu0
    %1142 = vdwg.mxu0
    %v1143 = vmul.f32 %v1140, 0.17677669
    %v1144 = vadd.f32 %v1143, %v85
    %v1145 = vsel %vm512, %v1144, -inf
    %1146 = vmax.xlane.f32.xlu0 %v1145
    %v1147 = vpop.xlane.xlu0 %1146
    %v1148 = vsub.f32 %v1144, %v1147
    %v1149 = vmul.f32 %v1148, 1.442695
    %v1150 = vpow.pop %v1149
    %v1151 = vsel %vm512, %v1150, 0.0
    %1152 = vadd.xlane.f32.xlu0 %v1151
    %v1153 = vpop.xlane.xlu0 %1152
    %v1154 = vrcp.pop %v1153
    %v1155 = vmul.f32 %v1150, %v1154
    %1156 = vrot.lane.b32.xlu0 %v404, 32
    %v1157 = vpop.permute.xlu0 %1156
    %1158 = vrot.lane.b32.xlu0 %v405, 32
    %v1159 = vpop.permute.xlu0 %1158
    %1160 = vrot.lane.b32.xlu0 %v406, 32
    %v1161 = vpop.permute.xlu0 %1160
    %1162 = vrot.lane.b32.xlu0 %v407, 32
    %v1163 = vpop.permute.xlu0 %1162
    %1164 = vrot.lane.b32.xlu0 %v408, 32
    %v1165 = vpop.permute.xlu0 %1164
    %1166 = vrot.lane.b32.xlu0 %v409, 32
    %v1167 = vpop.permute.xlu0 %1166
    %1168 = vrot.lane.b32.xlu0 %v410, 32
    %v1169 = vpop.permute.xlu0 %1168
    %1170 = vrot.lane.b32.xlu0 %v411, 32
    %v1171 = vpop.permute.xlu0 %1170
    %v1181 = vsel %vm512, %v1155, 0
    %1183 = vmatprep.subr.mxu0 0.0
    %1184 = vmatpush1.msra.mxu0 0.0
    %1185 = vmatprep.subr.mxu0 0.0
    %1186 = vmatpush1.msra.mxu0 0.0
    %1187 = vmatprep.subr.mxu0 0.0
    %1188 = vmatpush1.msra.mxu0 0.0
    %1189 = vmatprep.subr.mxu0 0.0
    %1190 = vmatpush1.msra.mxu0 0.0
    %1191 = vmatprep.subr.mxu0 0.0
    %1192 = vmatpush1.msra.mxu0 0.0
    %1193 = vmatprep.subr.mxu0 0.0
    %1194 = vmatpush1.msra.mxu0 0.0
    %1195 = vmatprep.subr.mxu0 0.0
    %1196 = vmatpush1.msra.mxu0 0.0
    %1197 = vmatprep.subr.mxu0 0.0
    %1198 = vmatpush1.msra.mxu0 0.0
    %1199 = vmatprep.subr.mxu0 0.0
    %1200 = vmatpush1.msra.mxu0 %v1171
    %1201 = vmatprep.subr.mxu0 0.0
    %1202 = vmatpush1.msra.mxu0 %v1169
    %1203 = vmatprep.subr.mxu0 0.0
    %1204 = vmatpush1.msra.mxu0 %v1167
    %1205 = vmatprep.subr.mxu0 0.0
    %1206 = vmatpush1.msra.mxu0 %v1165
    %1207 = vmatprep.subr.mxu0 0.0
    %1208 = vmatpush1.msra.mxu0 %v1163
    %1209 = vmatprep.subr.mxu0 0.0
    %1210 = vmatpush1.msra.mxu0 %v1161
    %1211 = vmatprep.subr.mxu0 0.0
    %1212 = vmatpush1.msra.mxu0 %v1159
    %1213 = vmatprep.subr.mxu0 0.0
    %1214 = vmatpush1.msra.mxu0 %v1157
    %1215 = vmatprep.subr.mxu0 0.0
    %1216 = vmatpush2.msra.mxu0 0.0
    %1217 = vmatprep.subr.mxu0 0.0
    %1218 = vmatpush2.msra.mxu0 0.0
    %1219 = vmatprep.subr.mxu0 0.0
    %1220 = vmatpush2.msra.mxu0 0.0
    %1221 = vmatprep.subr.mxu0 0.0
    %1222 = vmatpush2.msra.mxu0 0.0
    %1223 = vmatprep.subr.mxu0 0.0
    %1224 = vmatpush2.msra.mxu0 0.0
    %1225 = vmatprep.subr.mxu0 0.0
    %1226 = vmatpush2.msra.mxu0 0.0
    %1227 = vmatprep.subr.mxu0 0.0
    %1228 = vmatpush2.msra.mxu0 0.0
    %1229 = vmatprep.subr.mxu0 0.0
    %1230 = vmatpush2.msra.mxu0 0.0
    %1231 = vmatprep.subr.mxu0 0.0
    %1232 = vmatpush2.msra.mxu0 0.0
    %1233 = vmatprep.subr.mxu0 0.0
    %1234 = vmatpush2.msra.mxu0 0.0
    %1235 = vmatprep.subr.mxu0 0.0
    %1236 = vmatpush2.msra.mxu0 0.0
    %1237 = vmatprep.subr.mxu0 0.0
    %1238 = vmatpush2.msra.mxu0 0.0
    %1239 = vmatprep.subr.mxu0 0.0
    %1240 = vmatpush2.msra.mxu0 0.0
    %1241 = vmatprep.subr.mxu0 0.0
    %1242 = vmatpush2.msra.mxu0 0.0
    %1243 = vmatprep.subr.mxu0 0.0
    %1244 = vmatpush2.msra.mxu0 0.0
    %1245 = vmatprep.subr.mxu0 0.0
    %1246 = vmatpush2.msra.mxu0 0.0
    %1247 = vmatprep.mubr.f32.mxu0 0.0
    %1248 = vmatmul.mubr.f32.gmra.mxu0 %v1181
    %v1249 = vpop.f32.mrf.mxu0
    %v1250 = vadd.f32 0.0, %v1249
    %v1251 = vpop.f32.mrf.mxu0
    %1252 = vdwg.mxu0
    %1254 = vrot.lane.b32.xlu0 %v818, 32
    %v1255 = vpop.permute.xlu0 %1254
    %1258 = vrot.lane.b32.xlu0 %v1034, 64
    %v1259 = vpop.permute.xlu0 %1258
    %1262 = vrot.lane.b32.xlu0 %v1250, 96
    %v1263 = vpop.permute.xlu0 %1262
    %v1265 = vsel %vm412, %v594, %v1255
    %v1266 = vsel %vm512, %v1265, %v1259
    %vm1267 = vcmask 785408
    %v1268 = vsel %vm1267, %v1266, %v1263
    %v1269 = vpack.c.bf16 %v1268, %v1268
    %v1270 = vld [vmem:[#allocation7 + $0xc] sm:$0xf]
    %v1271 = vld [vmem:[#allocation7 + $0x28] sm:$0xf]
    %v1272 = vld [vmem:[#allocation7 + $0x44] sm:$0xf]
    %v1273 = vld [vmem:[#allocation7 + $0x60] sm:$0xf]
    %v1274 = vld [vmem:[#allocation7 + $0x7c] sm:$0xf]
    %v1275 = vld [vmem:[#allocation7 + $0x98] sm:$0xf]
    %v1276 = vld [vmem:[#allocation7 + $0xb4] sm:$0xf]
    %v1277 = vld [vmem:[#allocation7 + $0xd0] sm:$0xf]
    %v1278 = vld [vmem:[#allocation7 + $0xec] sm:$0xf]
    %v1279 = vld [vmem:[#allocation7 + $0x108] sm:$0xf]
    %v1280 = vld [vmem:[#allocation7 + $0x124] sm:$0xf]
    %v1281 = vld [vmem:[#allocation7 + $0x140] sm:$0xf]
    %v1282 = vld [vmem:[#allocation7 + $0x15c] sm:$0xf]
    %v1283 = vld [vmem:[#allocation7 + $0x178] sm:$0xf]
    %v1284 = vld [vmem:[#allocation7 + $0x194] sm:$0xf]
    %v1285 = vld [vmem:[#allocation7 + $0x1b0] sm:$0xf]
    %v1286 = vlaneseq
    %v1287 = vshrl.u32 %v1286, 7
    %v1288 = vsub.s32 3, %v1287
    %v1289 = vrot.slane %v82, %v1288
    %v1306 = vunpack.c.l.b16 %v1270
    %v1307 = vunpack.c.l.b16 %v1271
    %v1308 = vunpack.c.l.b16 %v1272
    %v1309 = vunpack.c.l.b16 %v1273
    %v1310 = vunpack.c.l.b16 %v1274
    %v1311 = vunpack.c.l.b16 %v1275
    %v1312 = vunpack.c.l.b16 %v1276
    %v1313 = vunpack.c.l.b16 %v1277
    %v1314 = vunpack.c.l.b16 %v1278
    %v1315 = vunpack.c.l.b16 %v1279
    %v1316 = vunpack.c.l.b16 %v1280
    %v1317 = vunpack.c.l.b16 %v1281
    %v1318 = vunpack.c.l.b16 %v1282
    %v1319 = vunpack.c.l.b16 %v1283
    %v1320 = vunpack.c.l.b16 %v1284
    %v1321 = vunpack.c.l.b16 %v1285
    %v1322 = vpack.c.b16 %v1307, %v1306
    %v1323 = vpack.c.b16 %v1309, %v1308
    %v1324 = vpack.c.b16 %v1311, %v1310
    %v1325 = vpack.c.b16 %v1313, %v1312
    %v1326 = vpack.c.b16 %v1315, %v1314
    %v1327 = vpack.c.b16 %v1317, %v1316
    %v1328 = vpack.c.b16 %v1319, %v1318
    %v1329 = vpack.c.b16 %v1321, %v1320
    %1338 = vmatprep.subr.bf16.mxu0 0
    %1339 = vmatpush1.bf16.msra.mxu0 %v1329
    %1340 = vmatprep.subr.bf16.mxu0 0
    %1341 = vmatpush1.bf16.msra.mxu0 %v1328
    %1342 = vmatprep.subr.bf16.mxu0 0
    %1343 = vmatpush1.bf16.msra.mxu0 %v1327
    %1344 = vmatprep.subr.bf16.mxu0 0
    %1345 = vmatpush1.bf16.msra.mxu0 %v1326
    %1346 = vmatprep.subr.bf16.mxu0 0
    %1347 = vmatpush1.bf16.msra.mxu0 %v1325
    %1348 = vmatprep.subr.bf16.mxu0 0
    %1349 = vmatpush1.bf16.msra.mxu0 %v1324
    %1350 = vmatprep.subr.bf16.mxu0 0
    %1351 = vmatpush1.bf16.msra.mxu0 %v1323
    %1352 = vmatprep.subr.bf16.mxu0 0
    %1353 = vmatpush1.bf16.msra.mxu0 %v1322
    %1354 = vmatprep.subr.bf16.mxu0 0
    %1355 = vmatpush2.bf16.msra.mxu0 0
    %1356 = vmatprep.subr.bf16.mxu0 0
    %1357 = vmatpush2.bf16.msra.mxu0 0
    %1358 = vmatprep.subr.bf16.mxu0 0
    %1359 = vmatpush2.bf16.msra.mxu0 0
    %1360 = vmatprep.subr.bf16.mxu0 0
    %1361 = vmatpush2.bf16.msra.mxu0 0
    %1362 = vmatprep.subr.bf16.mxu0 0
    %1363 = vmatpush2.bf16.msra.mxu0 0
    %1364 = vmatprep.subr.bf16.mxu0 0
    %1365 = vmatpush2.bf16.msra.mxu0 0
    %1366 = vmatprep.subr.bf16.mxu0 0
    %1367 = vmatpush2.bf16.msra.mxu0 0
    %1368 = vmatprep.subr.bf16.mxu0 0
    %1369 = vmatpush2.bf16.msra.mxu0 0
    %1370 = vmatprep.mubr.bf16.mxu0 0
    %1371 = vmatmul.mubr.bf16.gmra.mxu0 %v1269
    %v1372 = vpop.f32.mrf.mxu0
    %v1373 = vadd.f32 %v1289, %v1372
    %v1374 = vpop.f32.mrf.mxu0
    %v1375 = vpop.f32.mrf.mxu0
    %v1376 = vpop.f32.mrf.mxu0
    %1377 = vdwg.mxu0
    %v1378 = vadd.f32 %v74, %v1373
    %1379 = vadd.xlane.f32.xlu0 %v1378
    %v1380 = vpop.xlane.xlu0 %1379
    %v1381 = vrcp.pop 128.0
    %v1382 = vmul.f32 %v1380, %v1381
    %v1383 = vsub.f32 %v1378, %v1382
    %v1384 = vmul.f32 %v1383, %v1383
    %1385 = vadd.xlane.f32.xlu0 %v1384
    %v1386 = vpop.xlane.xlu0 %1385
    %v1387 = vmul.f32 %v1386, %v1381
    %v1388 = vadd.f32 %v1387, 1e-12
    %v1389 = vrsqrt.pop %v1388
    %v1390 = vmul.f32 %v1383, %v1389
    %v1391 = vlaneseq
    %v1392 = vshrl.u32 %v1391, 7
    %v1393 = vsub.s32 4, %v1392
    %v1394 = vrot.slane %v82, %v1393
    %v1395 = vmul.f32 %v1390, %v1394
    %v1396 = vlaneseq
    %v1397 = vshrl.u32 %v1396, 7
    %v1398 = vsub.s32 5, %v1397
    %v1399 = vrot.slane %v82, %v1398
    %v1400 = vadd.f32 %v1395, %v1399
    %v1401 = vpack.c.bf16 %v1400, %v1400
    %v1402 = vld [vmem:[#allocation7 + $0x10] sm:$0xff]
    %v1403 = vld [vmem:[#allocation7 + $0x2c] sm:$0xff]
    %v1404 = vld [vmem:[#allocation7 + $0x48] sm:$0xff]
    %v1405 = vld [vmem:[#allocation7 + $0x64] sm:$0xff]
    %v1406 = vld [vmem:[#allocation7 + $0x80] sm:$0xff]
    %v1407 = vld [vmem:[#allocation7 + $0x9c] sm:$0xff]
    %v1408 = vld [vmem:[#allocation7 + $0xb8] sm:$0xff]
    %v1409 = vld [vmem:[#allocation7 + $0xd4] sm:$0xff]
    %v1410 = vld [vmem:[#allocation7 + $0xf0] sm:$0xff]
    %v1411 = vld [vmem:[#allocation7 + $0x10c] sm:$0xff]
    %v1412 = vld [vmem:[#allocation7 + $0x128] sm:$0xff]
    %v1413 = vld [vmem:[#allocation7 + $0x144] sm:$0xff]
    %v1414 = vld [vmem:[#allocation7 + $0x160] sm:$0xff]
    %v1415 = vld [vmem:[#allocation7 + $0x17c] sm:$0xff]
    %v1416 = vld [vmem:[#allocation7 + $0x198] sm:$0xff]
    %v1417 = vld [vmem:[#allocation7 + $0x1b4] sm:$0xff]
    %v1418 = vlaneseq
    %v1419 = vshrl.u32 %v1418, 7
    %v1420 = vsub.s32 2, %v1419
    %v1421 = vrot.slane %v83, %v1420
    %v1422 = vlaneseq
    %v1423 = vshrl.u32 %v1422, 7
    %v1424 = vsub.s32 2, %v1423
    %v1425 = vrot.slane %v84, %v1424
    %v1442 = vunpack.c.l.b16 %v1402
    %v1443 = vunpack.c.h.b16 %v1402
    %v1444 = vunpack.c.l.b16 %v1403
    %v1445 = vunpack.c.h.b16 %v1403
    %v1446 = vunpack.c.l.b16 %v1404
    %v1447 = vunpack.c.h.b16 %v1404
    %v1448 = vunpack.c.l.b16 %v1405
    %v1449 = vunpack.c.h.b16 %v1405
    %v1450 = vunpack.c.l.b16 %v1406
    %v1451 = vunpack.c.h.b16 %v1406
    %v1452 = vunpack.c.l.b16 %v1407
    %v1453 = vunpack.c.h.b16 %v1407
    %v1454 = vunpack.c.l.b16 %v1408
    %v1455 = vunpack.c.h.b16 %v1408
    %v1456 = vunpack.c.l.b16 %v1409
    %v1457 = vunpack.c.h.b16 %v1409
    %v1458 = vunpack.c.l.b16 %v1410
    %v1459 = vunpack.c.h.b16 %v1410
    %v1460 = vunpack.c.l.b16 %v1411
    %v1461 = vunpack.c.h.b16 %v1411
    %v1462 = vunpack.c.l.b16 %v1412
    %v1463 = vunpack.c.h.b16 %v1412
    %v1464 = vunpack.c.l.b16 %v1413
    %v1465 = vunpack.c.h.b16 %v1413
    %v1466 = vunpack.c.l.b16 %v1414
    %v1467 = vunpack.c.h.b16 %v1414
    %v1468 = vunpack.c.l.b16 %v1415
    %v1469 = vunpack.c.h.b16 %v1415
    %v1470 = vunpack.c.l.b16 %v1416
    %v1471 = vunpack.c.h.b16 %v1416
    %v1472 = vunpack.c.l.b16 %v1417
    %v1473 = vunpack.c.h.b16 %v1417
    %v1474 = vpack.c.b16 %v1444, %v1442
    %v1475 = vpack.c.b16 %v1445, %v1443
    %v1476 = vpack.c.b16 %v1448, %v1446
    %v1477 = vpack.c.b16 %v1449, %v1447
    %v1478 = vpack.c.b16 %v1452, %v1450
    %v1479 = vpack.c.b16 %v1453, %v1451
    %v1480 = vpack.c.b16 %v1456, %v1454
    %v1481 = vpack.c.b16 %v1457, %v1455
    %v1482 = vpack.c.b16 %v1460, %v1458
    %v1483 = vpack.c.b16 %v1461, %v1459
    %v1484 = vpack.c.b16 %v1464, %v1462
    %v1485 = vpack.c.b16 %v1465, %v1463
    %v1486 = vpack.c.b16 %v1468, %v1466
    %v1487 = vpack.c.b16 %v1469, %v1467
    %v1488 = vpack.c.b16 %v1472, %v1470
    %v1489 = vpack.c.b16 %v1473, %v1471
    %1506 = vmatprep.subr.bf16.mxu0 %v1489
    %1507 = vmatpush1.bf16.msra.mxu0 %v1488
    %1508 = vmatprep.subr.bf16.mxu0 %v1487
    %1509 = vmatpush1.bf16.msra.mxu0 %v1486
    %1510 = vmatprep.subr.bf16.mxu0 %v1485
    %1511 = vmatpush1.bf16.msra.mxu0 %v1484
    %1512 = vmatprep.subr.bf16.mxu0 %v1483
    %1513 = vmatpush1.bf16.msra.mxu0 %v1482
    %1514 = vmatprep.subr.bf16.mxu0 %v1481
    %1515 = vmatpush1.bf16.msra.mxu0 %v1480
    %1516 = vmatprep.subr.bf16.mxu0 %v1479
    %1517 = vmatpush1.bf16.msra.mxu0 %v1478
    %1518 = vmatprep.subr.bf16.mxu0 %v1477
    %1519 = vmatpush1.bf16.msra.mxu0 %v1476
    %1520 = vmatprep.subr.bf16.mxu0 %v1475
    %1521 = vmatpush1.bf16.msra.mxu0 %v1474
    %1522 = vmatprep.subr.bf16.mxu0 0
    %1523 = vmatpush2.bf16.msra.mxu0 0
    %1524 = vmatprep.subr.bf16.mxu0 0
    %1525 = vmatpush2.bf16.msra.mxu0 0
    %1526 = vmatprep.subr.bf16.mxu0 0
    %1527 = vmatpush2.bf16.msra.mxu0 0
    %1528 = vmatprep.subr.bf16.mxu0 0
    %1529 = vmatpush2.bf16.msra.mxu0 0
    %1530 = vmatprep.subr.bf16.mxu0 0
    %1531 = vmatpush2.bf16.msra.mxu0 0
    %1532 = vmatprep.subr.bf16.mxu0 0
    %1533 = vmatpush2.bf16.msra.mxu0 0
    %1534 = vmatprep.subr.bf16.mxu0 0
    %1535 = vmatpush2.bf16.msra.mxu0 0
    %1536 = vmatprep.subr.bf16.mxu0 0
    %1537 = vmatpush2.bf16.msra.mxu0 0
    %1538 = vmatprep.mubr.bf16.mxu0 0
    %1539 = vmatmul.mubr.bf16.gmra.mxu0 %v1401
    %v1540 = vpop.f32.mrf.mxu0
    %v1541 = vadd.f32 %v1421, %v1540
    %v1542 = vpop.f32.mrf.mxu0
    %v1543 = vadd.f32 %v1425, %v1542
    %v1544 = vpop.f32.mrf.mxu0
    %v1545 = vpop.f32.mrf.mxu0
    %1546 = vdwg.mxu0
    %v1547 = vmul.f32 %v1541, %v1541
    %v1548 = vmul.f32 %v1543, %v1543
    %v1549 = vmul.f32 %v1541, %v1547
    %v1550 = vmul.f32 %v1543, %v1548
    %v1551 = vmul.f32 %v1549, 0.044715
    %v1552 = vmul.f32 %v1550, 0.044715
    %v1553 = vadd.f32 %v1541, %v1551
    %v1554 = vadd.f32 %v1543, %v1552
    %v1555 = vmul.f32 %v1553, 0.7978846
    %v1556 = vmul.f32 %v1554, 0.7978846
    %v1557 = vtanh.pop %v1555
    %v1558 = vtanh.pop %v1556
    %v1559 = vadd.f32 %v1557, 1.0
    %v1560 = vadd.f32 %v1558, 1.0
    %v1561 = vmul.f32 %v1559, 0.5
    %v1562 = vmul.f32 %v1560, 0.5
    %v1563 = vmul.f32 %v1541, %v1561
    %v1564 = vmul.f32 %v1543, %v1562
    %v1565 = vpack.c.bf16 %v1563, %v1563
    %v1566 = vpack.c.bf16 %v1564, %v1564
    %v1567 = vld [vmem:[#allocation8] sm:$0xf]
    %v1568 = vld [vmem:[#allocation8 + $0x4] sm:$0xf]
    %v1569 = vld [vmem:[#allocation8 + $0x8] sm:$0xf]
    %v1570 = vld [vmem:[#allocation8 + $0xc] sm:$0xf]
    %v1571 = vld [vmem:[#allocation8 + $0x10] sm:$0xf]
    %v1572 = vld [vmem:[#allocation8 + $0x14] sm:$0xf]
    %v1573 = vld [vmem:[#allocation8 + $0x18] sm:$0xf]
    %v1574 = vld [vmem:[#allocation8 + $0x1c] sm:$0xf]
    %v1575 = vld [vmem:[#allocation8 + $0x20] sm:$0xf]
    %v1576 = vld [vmem:[#allocation8 + $0x24] sm:$0xf]
    %v1577 = vld [vmem:[#allocation8 + $0x28] sm:$0xf]
    %v1578 = vld [vmem:[#allocation8 + $0x2c] sm:$0xf]
    %v1579 = vld [vmem:[#allocation8 + $0x30] sm:$0xf]
    %v1580 = vld [vmem:[#allocation8 + $0x34] sm:$0xf]
    %v1581 = vld [vmem:[#allocation8 + $0x38] sm:$0xf]
    %v1582 = vld [vmem:[#allocation8 + $0x3c] sm:$0xf]
    %v1583 = vld [vmem:[#allocation8 + $0x40] sm:$0xf]
    %v1584 = vld [vmem:[#allocation8 + $0x44] sm:$0xf]
    %v1585 = vld [vmem:[#allocation8 + $0x48] sm:$0xf]
    %v1586 = vld [vmem:[#allocation8 + $0x4c] sm:$0xf]
    %v1587 = vld [vmem:[#allocation8 + $0x50] sm:$0xf]
    %v1588 = vld [vmem:[#allocation8 + $0x54] sm:$0xf]
    %v1589 = vld [vmem:[#allocation8 + $0x58] sm:$0xf]
    %v1590 = vld [vmem:[#allocation8 + $0x5c] sm:$0xf]
    %v1591 = vld [vmem:[#allocation8 + $0x60] sm:$0xf]
    %v1592 = vld [vmem:[#allocation8 + $0x64] sm:$0xf]
    %v1593 = vld [vmem:[#allocation8 + $0x68] sm:$0xf]
    %v1594 = vld [vmem:[#allocation8 + $0x6c] sm:$0xf]
    %v1595 = vld [vmem:[#allocation8 + $0x70] sm:$0xf]
    %v1596 = vld [vmem:[#allocation8 + $0x74] sm:$0xf]
    %v1597 = vld [vmem:[#allocation8 + $0x78] sm:$0xf]
    %v1598 = vld [vmem:[#allocation8 + $0x7c] sm:$0xf]
    %v1599 = vlaneseq
    %v1600 = vshrl.u32 %v1599, 7
    %v1601 = vsub.s32 6, %v1600
    %v1602 = vrot.slane %v82, %v1601
    %v1635 = vunpack.c.l.b16 %v1567
    %v1636 = vunpack.c.l.b16 %v1568
    %v1637 = vunpack.c.l.b16 %v1569
    %v1638 = vunpack.c.l.b16 %v1570
    %v1639 = vunpack.c.l.b16 %v1571
    %v1640 = vunpack.c.l.b16 %v1572
    %v1641 = vunpack.c.l.b16 %v1573
    %v1642 = vunpack.c.l.b16 %v1574
    %v1643 = vunpack.c.l.b16 %v1575
    %v1644 = vunpack.c.l.b16 %v1576
    %v1645 = vunpack.c.l.b16 %v1577
    %v1646 = vunpack.c.l.b16 %v1578
    %v1647 = vunpack.c.l.b16 %v1579
    %v1648 = vunpack.c.l.b16 %v1580
    %v1649 = vunpack.c.l.b16 %v1581
    %v1650 = vunpack.c.l.b16 %v1582
    %v1651 = vunpack.c.l.b16 %v1583
    %v1652 = vunpack.c.l.b16 %v1584
    %v1653 = vunpack.c.l.b16 %v1585
    %v1654 = vunpack.c.l.b16 %v1586
    %v1655 = vunpack.c.l.b16 %v1587
    %v1656 = vunpack.c.l.b16 %v1588
    %v1657 = vunpack.c.l.b16 %v1589
    %v1658 = vunpack.c.l.b16 %v1590
    %v1659 = vunpack.c.l.b16 %v1591
    %v1660 = vunpack.c.l.b16 %v1592
    %v1661 = vunpack.c.l.b16 %v1593
    %v1662 = vunpack.c.l.b16 %v1594
    %v1663 = vunpack.c.l.b16 %v1595
    %v1664 = vunpack.c.l.b16 %v1596
    %v1665 = vunpack.c.l.b16 %v1597
    %v1666 = vunpack.c.l.b16 %v1598
    %v1667 = vpack.c.b16 %v1636, %v1635
    %v1668 = vpack.c.b16 %v1638, %v1637
    %v1669 = vpack.c.b16 %v1640, %v1639
    %v1670 = vpack.c.b16 %v1642, %v1641
    %v1671 = vpack.c.b16 %v1644, %v1643
    %v1672 = vpack.c.b16 %v1646, %v1645
    %v1673 = vpack.c.b16 %v1648, %v1647
    %v1674 = vpack.c.b16 %v1650, %v1649
    %v1675 = vpack.c.b16 %v1652, %v1651
    %v1676 = vpack.c.b16 %v1654, %v1653
    %v1677 = vpack.c.b16 %v1656, %v1655
    %v1678 = vpack.c.b16 %v1658, %v1657
    %v1679 = vpack.c.b16 %v1660, %v1659
    %v1680 = vpack.c.b16 %v1662, %v1661
    %v1681 = vpack.c.b16 %v1664, %v1663
    %v1682 = vpack.c.b16 %v1666, %v1665
    %1699 = vmatprep.subr.bf16.mxu0 0
    %1700 = vmatpush1.bf16.msra.mxu0 %v1674
    %1701 = vmatprep.subr.bf16.mxu0 0
    %1702 = vmatpush1.bf16.msra.mxu0 %v1673
    %1703 = vmatprep.subr.bf16.mxu0 0
    %1704 = vmatpush1.bf16.msra.mxu0 %v1672
    %1705 = vmatprep.subr.bf16.mxu0 0
    %1706 = vmatpush1.bf16.msra.mxu0 %v1671
    %1707 = vmatprep.subr.bf16.mxu0 0
    %1708 = vmatpush1.bf16.msra.mxu0 %v1670
    %1709 = vmatprep.subr.bf16.mxu0 0
    %1710 = vmatpush1.bf16.msra.mxu0 %v1669
    %1711 = vmatprep.subr.bf16.mxu0 0
    %1712 = vmatpush1.bf16.msra.mxu0 %v1668
    %1713 = vmatprep.subr.bf16.mxu0 0
    %1714 = vmatpush1.bf16.msra.mxu0 %v1667
    %1715 = vmatprep.subr.bf16.mxu0 0
    %1716 = vmatpush2.bf16.msra.mxu0 %v1682
    %1717 = vmatprep.subr.bf16.mxu0 0
    %1718 = vmatpush2.bf16.msra.mxu0 %v1681
    %1719 = vmatprep.subr.bf16.mxu0 0
    %1720 = vmatpush2.bf16.msra.mxu0 %v1680
    %1721 = vmatprep.subr.bf16.mxu0 0
    %1722 = vmatpush2.bf16.msra.mxu0 %v1679
    %1723 = vmatprep.subr.bf16.mxu0 0
    %1724 = vmatpush2.bf16.msra.mxu0 %v1678
    %1725 = vmatprep.subr.bf16.mxu0 0
    %1726 = vmatpush2.bf16.msra.mxu0 %v1677
    %1727 = vmatprep.subr.bf16.mxu0 0
    %1728 = vmatpush2.bf16.msra.mxu0 %v1676
    %1729 = vmatprep.subr.bf16.mxu0 0
    %1730 = vmatpush2.bf16.msra.mxu0 %v1675
    %1731 = vmatprep.mubr.bf16.mxu0 %v1566
    %1732 = vmatmul.mubr.bf16.gmra.mxu0 %v1565
    %v1733 = vpop.f32.mrf.mxu0
    %v1734 = vadd.f32 %v1602, %v1733
    %v1735 = vpop.f32.mrf.mxu0
    %v1736 = vpop.f32.mrf.mxu0
    %v1737 = vpop.f32.mrf.mxu0
    %1738 = vdwg.mxu0
    %v1739 = vadd.f32 %v1400, %v1734
    %1740 = vadd.xlane.f32.xlu0 %v1739
    %v1741 = vpop.xlane.xlu0 %1740
    %v1742 = vmul.f32 %v1741, %v1381
    %v1743 = vsub.f32 %v1739, %v1742
    %v1744 = vmul.f32 %v1743, %v1743
    %1745 = vadd.xlane.f32.xlu0 %v1744
    %v1746 = vpop.xlane.xlu0 %1745
    %v1747 = vmul.f32 %v1746, %v1381
    %v1748 = vadd.f32 %v1747, 1e-12
    %v1749 = vrsqrt.pop %v1748
    %v1750 = vmul.f32 %v1743, %v1749
    %v1751 = vlaneseq
    %v1752 = vshrl.u32 %v1751, 7
    %v1753 = vsub.s32 7, %v1752
    %v1754 = vrot.slane %v82, %v1753
    %v1755 = vmul.f32 %v1750, %v1754
    %v1756 = vlaneseq
    %v1757 = vshrl.u32 %v1756, 7
    %v1758 = vsub.s32 0, %v1757
    %v1759 = vrot.slane %v83, %v1758
    %v1760 = vadd.f32 %v1755, %v1759
    %v1761 = vmul.f32 %v1760, %v86
    %v1762 = vpack.c.bf16 %v1761, %v1761
    %v1763 = vld [vmem:[#allocation7 + $0x18] sm:$0xf]
    %v1764 = vld [vmem:[#allocation7 + $0x34] sm:$0xf]
    %v1765 = vld [vmem:[#allocation7 + $0x50] sm:$0xf]
    %v1766 = vld [vmem:[#allocation7 + $0x6c] sm:$0xf]
    %v1767 = vld [vmem:[#allocation7 + $0x88] sm:$0xf]
    %v1768 = vld [vmem:[#allocation7 + $0xa4] sm:$0xf]
    %v1769 = vld [vmem:[#allocation7 + $0xc0] sm:$0xf]
    %v1770 = vld [vmem:[#allocation7 + $0xdc] sm:$0xf]
    %v1771 = vld [vmem:[#allocation7 + $0xf8] sm:$0xf]
    %v1772 = vld [vmem:[#allocation7 + $0x114] sm:$0xf]
    %v1773 = vld [vmem:[#allocation7 + $0x130] sm:$0xf]
    %v1774 = vld [vmem:[#allocation7 + $0x14c] sm:$0xf]
    %v1775 = vld [vmem:[#allocation7 + $0x168] sm:$0xf]
    %v1776 = vld [vmem:[#allocation7 + $0x184] sm:$0xf]
    %v1777 = vld [vmem:[#allocation7 + $0x1a0] sm:$0xf]
    %v1778 = vld [vmem:[#allocation7 + $0x1bc] sm:$0xf]
    %v1795 = vunpack.c.l.b16 %v1763
    %v1796 = vunpack.c.l.b16 %v1764
    %v1797 = vunpack.c.l.b16 %v1765
    %v1798 = vunpack.c.l.b16 %v1766
    %v1799 = vunpack.c.l.b16 %v1767
    %v1800 = vunpack.c.l.b16 %v1768
    %v1801 = vunpack.c.l.b16 %v1769
    %v1802 = vunpack.c.l.b16 %v1770
    %v1803 = vunpack.c.l.b16 %v1771
    %v1804 = vunpack.c.l.b16 %v1772
    %v1805 = vunpack.c.l.b16 %v1773
    %v1806 = vunpack.c.l.b16 %v1774
    %v1807 = vunpack.c.l.b16 %v1775
    %v1808 = vunpack.c.l.b16 %v1776
    %v1809 = vunpack.c.l.b16 %v1777
    %v1810 = vunpack.c.l.b16 %v1778
    %v1811 = vpack.c.b16 %v1796, %v1795
    %v1812 = vpack.c.b16 %v1798, %v1797
    %v1813 = vpack.c.b16 %v1800, %v1799
    %v1814 = vpack.c.b16 %v1802, %v1801
    %v1815 = vpack.c.b16 %v1804, %v1803
    %v1816 = vpack.c.b16 %v1806, %v1805
    %v1817 = vpack.c.b16 %v1808, %v1807
    %v1818 = vpack.c.b16 %v1810, %v1809
    %1827 = vmatprep.subr.bf16.mxu0 0
    %1828 = vmatpush1.bf16.msra.mxu0 %v1818
    %1829 = vmatprep.subr.bf16.mxu0 0
    %1830 = vmatpush1.bf16.msra.mxu0 %v1817
    %1831 = vmatprep.subr.bf16.mxu0 0
    %1832 = vmatpush1.bf16.msra.mxu0 %v1816
    %1833 = vmatprep.subr.bf16.mxu0 0
    %1834 = vmatpush1.bf16.msra.mxu0 %v1815
    %1835 = vmatprep.subr.bf16.mxu0 0
    %1836 = vmatpush1.bf16.msra.mxu0 %v1814
    %1837 = vmatprep.subr.bf16.mxu0 0
    %1838 = vmatpush1.bf16.msra.mxu0 %v1813
    %1839 = vmatprep.subr.bf16.mxu0 0
    %1840 = vmatpush1.bf16.msra.mxu0 %v1812
    %1841 = vmatprep.subr.bf16.mxu0 0
    %1842 = vmatpush1.bf16.msra.mxu0 %v1811
    %1843 = vmatprep.subr.bf16.mxu0 0
    %1844 = vmatpush2.bf16.msra.mxu0 0
    %1845 = vmatprep.subr.bf16.mxu0 0
    %1846 = vmatpush2.bf16.msra.mxu0 0
    %1847 = vmatprep.subr.bf16.mxu0 0
    %1848 = vmatpush2.bf16.msra.mxu0 0
    %1849 = vmatprep.subr.bf16.mxu0 0
    %1850 = vmatpush2.bf16.msra.mxu0 0
    %1851 = vmatprep.subr.bf16.mxu0 0
    %1852 = vmatpush2.bf16.msra.mxu0 0
    %1853 = vmatprep.subr.bf16.mxu0 0
    %1854 = vmatpush2.bf16.msra.mxu0 0
    %1855 = vmatprep.subr.bf16.mxu0 0
    %1856 = vmatpush2.bf16.msra.mxu0 0
    %1857 = vmatprep.subr.bf16.mxu0 0
    %1858 = vmatpush2.bf16.msra.mxu0 0
    %1859 = vmatprep.mubr.bf16.mxu0 0
    %1860 = vmatmul.mubr.bf16.gmra.mxu0 %v1762
    %v1861 = vpop.f32.mrf.mxu0
    %v1862 = vadd.f32 0.0, %v1861
    %v1863 = vpop.f32.mrf.mxu0
    %v1864 = vpop.f32.mrf.mxu0
    %v1865 = vpop.f32.mrf.mxu0
    %1866 = vdwg.mxu0
    %v1867 = vmul.f32 %v1862, 0.2
    %v1868 = vlaneseq
    %v1869 = vshrl.u32 %v1868, 7
    %v1870 = vsub.s32 1, %v1869
    %v1871 = vrot.slane %v83, %v1870
    %v1872 = vadd.f32 %v1867, %v1871
    %v1873 = vsub.f32 %v1872, %v87
    %v1874 = vmul.f32 %v1873, %v1873
    %1875 = vadd.xlane.f32.xlu0 %v1874
    %v1876 = vpop.xlane.xlu0 %1875
    %v1877 = vrot.slane %v1876, 4
    %v1878 = vadd.f32 %v1876, %v1877
    %v1879 = vrot.slane %v1878, 2
    %v1880 = vadd.f32 %v1878, %v1879
    %v1881 = vrot.slane %v1880, 1
    %v1882 = vadd.f32 %v1880, %v1881
    %s1883 = vtos %v1882
    %s1884 = smul.f32 %s1883, 0.015625
    %v1885 = vstv %s1884
    %v1886 = vrsqrt.pop %v1885
    %v1887 = vmul.f32 %v1885, %v1886
    %vm1888 = vcmp.eq.f32.partialorder %v1885, inf
    %v1889 = vsel %vm1888, %v1885, %v1887
    %vm1890 = vcmp.eq.f32.partialorder %v1885, 0.0
    %v1891 = vand.u32 %v1885, 2147483648
    %v1892 = vsel %vm1890, %v1891, %v1889
    %s1893 = vtos %v1892
    %v1894 = vstv %s1893
    %1895 = vst [vmem:[#allocation10] sm:$0x1] %v1894
    // Predicated region
    $region34: #{tpu_custom_call.1} parent=1 // pred_check
      _
    $region35: #{tpu_custom_call.1} parent=1 // pred_check_branch
      %1897 = sbr.rel (0) target = $region37
    $region36: #{tpu_custom_call.1} parent=1 // pred_region
      %s1899 = ssub.s32 16, 16
      %1900 = vsyncadd [#allocation4], %s1899
      %s1902 = sshll.u32 [#allocation10], 4
      %s1903 = int_to_ptr.vmem [resolvable:$true] %s1902
      %1905 = dma.vmem_to_hbm [thread:$0]  %s1903, 16, %s4, [#allocation4]
    $region37: #{tpu_custom_call.1} parent=1 // pred_fallthru
      _
    // Predicated region
    $region38: #{tpu_custom_call.1} parent=1 // pred_check
      _
    $region39: #{tpu_custom_call.1} parent=1 // pred_check_branch
      %1907 = sbr.rel (0) target = $region41
    $region40: #{tpu_custom_call.1} parent=1 // pred_region
      %1908 = dma.done [#allocation4], 16
    $region41: #{tpu_custom_call.1} parent=1 // pred_fallthru
      _
    %1909 = vsyncpa [#allocation3], 1
    %1910 = vsyncpa [#allocation6], 1
    %1911 = vsyncpa [#allocation9], 1
    %1912 = vsyncpa [#allocation4], 1

</llo_original>
